<compile_context>
chip_gen: v6e
topology: v6e:2x2x1
jax: 0.10.0
libtpu: 0.0.40
codegen_flags: <defaults>
</compile_context>

<pallas_src>
import functools

import jax
import jax.numpy as jnp
from jax.experimental import pallas as pl
from jax.experimental.pallas import tpu as pltpu

# ----------------------------- config (small) -------------------------------
DIM = 32           # model dim
HEADS = 4          # number of heads
DIM_HEAD = 8       # per-head dim
DIM_INNER = HEADS * DIM_HEAD   # 32
BATCH = 2
SEQ = 8
OUT_PAD = 128      # lane-dense padded output width (>= DIM, multiple of 128)

MASK_BIAS = -1e30  # large finite additive bias for masked keys (no inf/NaN)
NEG_MAX = -jnp.finfo(jnp.float32).max  # reference-side masked_fill value


# ------------------------------ fused kernel --------------------------------
def _attention_kernel(x_ref, mb_ref, wq_ref, bq_ref, wk_ref, wv_ref,
                      wg_ref, bg_ref, wo_ref, o_ref, *, heads):
    """One batch element of the whole Attention forward.

    x  : (1, N, D)       bf16 tokens for this batch
    mb : (1, 1, N)       f32 additive key-mask bias (0 keep / -1e30 drop)
    wq : (H, D, Dh)      bf16, softmax scale pre-folded
    bq : (H, 1, Dh)      f32,  softmax scale pre-folded
    wk : (H, D, Dh)      bf16
    wv : (H, D, Dh)      bf16
    wg : (H, D, Dh)      bf16 gate projection
    bg : (H, 1, Dh)      f32
    wo : (H, Dh, 128)    bf16 output projection, lane-padded to 128
    o  : (1, N, 128)     f32 lane-dense output slab
    """
    f32 = jnp.float32
    bf16 = jnp.bfloat16

    x = x_ref[0]                                     # [N, D] bf16
    n, d = x.shape
    xh = jnp.broadcast_to(x, (heads, n, d))          # [H, N, D] (tiny replicate)

    # Head-batched projections (batch dim = H, contraction over D).  MXU in
    # bf16, f32 accumulation; biases added in f32.
    q = jnp.einsum("hnd,hde->hne", xh, wq_ref[...],
                   preferred_element_type=f32) + bq_ref[...]          # [H,N,Dh]
    k = jnp.einsum("hnd,hde->hne", xh, wk_ref[...],
                   preferred_element_type=f32)                        # [H,N,Dh]
    v = jnp.einsum("hnd,hde->hne", xh, wv_ref[...],
                   preferred_element_type=f32)                        # [H,N,Dh]
    g = jnp.einsum("hnd,hde->hne", xh, wg_ref[...],
                   preferred_element_type=f32) + bg_ref[...]          # [H,N,Dh]

    # Scores for all heads at once; rhs contracts on its last dim so no
    # transpose is materialized.
    sim = jnp.einsum("hqd,hkd->hqk", q.astype(bf16), k.astype(bf16),
                     preferred_element_type=f32)                      # [H,N,N]
    sim = sim + mb_ref[...]                          # additive key mask (finite)

    # softmax over keys, f32, exact normalize (matches torch softmax(dim=-1)).
    m = jnp.max(sim, axis=-1, keepdims=True)
    p = jnp.exp(sim - m)
    attn = p / jnp.sum(p, axis=-1, keepdims=True)

    out = jnp.einsum("hqk,hkd->hqd", attn.astype(bf16), v.astype(bf16),
                     preferred_element_type=f32)                      # [H,N,Dh]

    # Sigmoid output gate (f32 elementwise), then fused merge-heads + to_out:
    # sum_h gated_h @ wo_h  -- no head concat / transpose needed.
    gated = (out * jax.nn.sigmoid(g)).astype(bf16)                    # [H,N,Dh]
    yo = jnp.einsum("hnd,hdo->hno", gated, wo_ref[...],
                    preferred_element_type=f32)                       # [H,N,128]
    o_ref[0] = jnp.sum(yo, axis=0).astype(o_ref.dtype)                # [N,128]


# ------------------------- parameter prep (one-time) ------------------------
def fuse_params(params, heads=HEADS, dim_head=DIM_HEAD, out_pad=OUT_PAD):
    """Re-lay weights head-major, fold the softmax scale into q, pad wo."""
    d_model = params["wq"].shape[0]
    scale = dim_head ** -0.5

    def head_major(w):  # [D, H*Dh] -> [H, D, Dh]
        return w.reshape(d_model, heads, dim_head).transpose(1, 0, 2)

    wk, wv = jnp.split(params["wkv"], 2, axis=1)
    wo3 = params["wo"].reshape(heads, dim_head, d_model)
    wo3 = jnp.pad(wo3, ((0, 0), (0, 0), (0, out_pad - d_model)))  # lane-dense

    return {
        "wq": head_major(params["wq"] * scale).astype(jnp.bfloat16),
        "bq": (params["bq"] * scale).reshape(heads, 1, dim_head).astype(jnp.float32),
        "wk": head_major(wk).astype(jnp.bfloat16),
        "wv": head_major(wv).astype(jnp.bfloat16),
        "wg": head_major(params["wg"]).astype(jnp.bfloat16),
        "bg": params["bg"].reshape(heads, 1, dim_head).astype(jnp.float32),
        "wo": wo3.astype(jnp.bfloat16),
    }


# ------------------------------- forward pass -------------------------------
def attention_forward(fused, seq, mask=None):
    """Pallas equivalent of megafold Attention.forward (full attention path)."""
    B, N, D = seq.shape
    H, Dh = HEADS, DIM_HEAD
    di = H * Dh

    x = seq.astype(jnp.bfloat16)                               # [B, N, D]
    if mask is None:
        mask_bias = jnp.zeros((B, 1, N), jnp.float32)
    else:
        mask_bias = jnp.where(mask, 0.0, MASK_BIAS)[:, None, :].astype(jnp.float32)

    # Advisory cost estimate so XLA schedules around the custom call.
    flops = 2 * B * N * (4 * D * di + 2 * H * N * Dh + di * OUT_PAD)
    transcendentals = B * (H * N * N + N * di)                 # exp + sigmoid
    bytes_accessed = (
        x.size * 2 + mask_bias.size * 4
        + sum(int(v.size) * v.dtype.itemsize for v in fused.values())
        + B * N * OUT_PAD * 4)

    kern = functools.partial(_attention_kernel, heads=H)
    out_pad = pl.pallas_call(
        kern,
        out_shape=jax.ShapeDtypeStruct((B, N, OUT_PAD), jnp.float32),
        grid=(B,),
        in_specs=[
            pl.BlockSpec((1, N, D), lambda b: (b, 0, 0)),          # x
            pl.BlockSpec((1, 1, N), lambda b: (b, 0, 0)),          # mask bias
            pl.BlockSpec((H, D, Dh), lambda b: (0, 0, 0)),         # wq (scaled)
            pl.BlockSpec((H, 1, Dh), lambda b: (0, 0, 0)),         # bq (scaled)
            pl.BlockSpec((H, D, Dh), lambda b: (0, 0, 0)),         # wk
            pl.BlockSpec((H, D, Dh), lambda b: (0, 0, 0)),         # wv
            pl.BlockSpec((H, D, Dh), lambda b: (0, 0, 0)),         # wg
            pl.BlockSpec((H, 1, Dh), lambda b: (0, 0, 0)),         # bg
            pl.BlockSpec((H, Dh, OUT_PAD), lambda b: (0, 0, 0)),   # wo (padded)
        ],
        out_specs=pl.BlockSpec((1, N, OUT_PAD), lambda b: (b, 0, 0)),
        compiler_params=pltpu.CompilerParams(
            dimension_semantics=("parallel",),          # megacore-shardable
            vmem_limit_bytes=48 * 1024 * 1024),
        cost_estimate=pl.CostEstimate(
            flops=flops, transcendentals=transcendentals,
            bytes_accessed=bytes_accessed),
    )(x, mask_bias, fused["wq"], fused["bq"], fused["wk"], fused["wv"],
      fused["wg"], fused["bg"], fused["wo"])

    return out_pad[:, :, :D].astype(seq.dtype)         # drop lane padding


# ----------------------------- pure-JAX reference ---------------------------
def attention_reference(params, seq, mask):
    B, N, D = seq.shape
    H, Dh = HEADS, DIM_HEAD
    q = seq @ params["wq"] + params["bq"]
    kv = seq @ params["wkv"]
    k, v = jnp.split(kv, 2, axis=-1)

    def split_heads(t):
        return t.reshape(B, N, H, Dh).transpose(0, 2, 1, 3)

    qh, kh, vh = split_heads(q), split_heads(k), split_heads(v)
    qh = qh * (Dh ** -0.5)
    sim = jnp.einsum("bhid,bhjd->bhij", qh, kh)
    sim = jnp.where(mask[:, None, None, :], sim, NEG_MAX)
    attn = jax.nn.softmax(sim, axis=-1)
    out = jnp.einsum("bhij,bhjd->bhid", attn, vh)
    out = out.transpose(0, 2, 1, 3).reshape(B, N, H * Dh)
    gates = seq @ params["wg"] + params["bg"]
    out = out * jax.nn.sigmoid(gates)
    return out @ params["wo"]


# ----------------------------------- main ------------------------------------
if __name__ == "__main__":
    key = jax.random.PRNGKey(0)
    ks = jax.random.split(key, 6)

    # deterministic parameter init (stored as [in, out] so forward is x @ W)
    params = {
        "wq": 0.1 * jax.random.normal(ks[0], (DIM, DIM_INNER), jnp.float32),
        "bq": 0.02 * jax.random.normal(ks[1], (DIM_INNER,), jnp.float32),
        "wkv": 0.1 * jax.random.normal(ks[2], (DIM, 2 * DIM_INNER), jnp.float32),
        # to_gates: zero weight, bias = init_gate_bias (-2.0), per module __init__
        "wg": jnp.zeros((DIM, DIM_INNER), jnp.float32),
        "bg": jnp.full((DIM_INNER,), -2.0, jnp.float32),
        "wo": 0.1 * jax.random.normal(ks[3], (DIM_INNER, DIM), jnp.float32),
    }

    seq = jax.random.normal(ks[4], (BATCH, SEQ, DIM), jnp.float32)
    mask = jax.random.bernoulli(ks[5], 0.8, (BATCH, SEQ))
    mask = mask.at[:, 0].set(True)  # keep at least one valid key per batch

    fused = fuse_params(params)
    out = jax.block_until_ready(attention_forward(fused, seq, mask))

    ref = attention_reference(params, seq, mask)
    assert out.shape == (BATCH, SEQ, DIM)
    max_err = float(jnp.max(jnp.abs(out - ref)))
    # tolerance accounts for bf16 MXU inputs (f32 accumulation / softmax)
    assert jnp.allclose(out, ref, atol=2.5e-3, rtol=2e-2), max_err

    print("KERNEL_OK")
</pallas_src>

<mosaic_0001>
module attributes {stable_mosaic.version = 11 : i64} {
  func.func @_attention_kernel(%arg0: i32, %arg1: memref<1x8x32xbf16, #tpu.memory_space<vmem>>, %arg2: memref<1x1x8xf32, #tpu.memory_space<vmem>>, %arg3: memref<4x32x8xbf16, #tpu.memory_space<vmem>>, %arg4: memref<4x1x8xf32, #tpu.memory_space<vmem>>, %arg5: memref<4x32x8xbf16, #tpu.memory_space<vmem>>, %arg6: memref<4x32x8xbf16, #tpu.memory_space<vmem>>, %arg7: memref<4x32x8xbf16, #tpu.memory_space<vmem>>, %arg8: memref<4x1x8xf32, #tpu.memory_space<vmem>>, %arg9: memref<4x8x128xbf16, #tpu.memory_space<vmem>>, %arg10: memref<1x8x128xf32, #tpu.memory_space<vmem>>) attributes {dimension_semantics = [#tpu.dimension_semantics<parallel>], iteration_bounds = array<i64: 2>, scalar_prefetch = 0 : i64, scratch_operands = 0 : i64, tpu.core_type = #tpu.core_type<tc>, window_params = [{transform_indices = @transform_0, window_bounds = array<i64: 1, 8, 32>}, {transform_indices = @transform_1, window_bounds = array<i64: 1, 1, 8>}, {pipeline_mode = #tpu.pipeline_mode<synchronous>, transform_indices = @transform_2, window_bounds = array<i64: 4, 32, 8>}, {pipeline_mode = #tpu.pipeline_mode<synchronous>, transform_indices = @transform_3, window_bounds = array<i64: 4, 1, 8>}, {pipeline_mode = #tpu.pipeline_mode<synchronous>, transform_indices = @transform_4, window_bounds = array<i64: 4, 32, 8>}, {pipeline_mode = #tpu.pipeline_mode<synchronous>, transform_indices = @transform_5, window_bounds = array<i64: 4, 32, 8>}, {pipeline_mode = #tpu.pipeline_mode<synchronous>, transform_indices = @transform_6, window_bounds = array<i64: 4, 32, 8>}, {pipeline_mode = #tpu.pipeline_mode<synchronous>, transform_indices = @transform_7, window_bounds = array<i64: 4, 1, 8>}, {pipeline_mode = #tpu.pipeline_mode<synchronous>, transform_indices = @transform_8, window_bounds = array<i64: 4, 8, 128>}, {transform_indices = @transform_9, window_bounds = array<i64: 1, 8, 128>}]} {
    %c0 = arith.constant 0 : index
    %c0_0 = arith.constant 0 : index
    %c0_1 = arith.constant 0 : index
    %0 = vector.load %arg1[%c0, %c0_0, %c0_1] : memref<1x8x32xbf16, #tpu.memory_space<vmem>>, vector<1x8x32xbf16>
    %1 = vector.shape_cast %0 : vector<1x8x32xbf16> to vector<8x32xbf16>
    %2 = vector.shape_cast %1 : vector<8x32xbf16> to vector<1x8x32xbf16>
    %3 = vector.broadcast %2 : vector<1x8x32xbf16> to vector<4x8x32xbf16>
    %c0_2 = arith.constant 0 : index
    %c0_3 = arith.constant 0 : index
    %c0_4 = arith.constant 0 : index
    %4 = vector.load %arg3[%c0_2, %c0_3, %c0_4] : memref<4x32x8xbf16, #tpu.memory_space<vmem>>, vector<4x32x8xbf16>
    "tpu.trace_start"() <{level = 10 : i32, message = "hnd,hde->hne"}> : () -> ()
    %cst = arith.constant dense<0.000000e+00> : vector<4x8x8xf32>
    %5 = tpu.matmul %3, %4, %cst {dimension_numbers = #tpu.dot_dimension_numbers<[2], [1], [1], [2], [0, 0, 0, 1, 1, 2], [0], [0]>} : vector<4x8x32xbf16>, vector<4x32x8xbf16>, vector<4x8x8xf32> -> vector<4x8x8xf32>
    "tpu.trace_stop"() : () -> ()
    %c0_5 = arith.constant 0 : index
    %c0_6 = arith.constant 0 : index
    %c0_7 = arith.constant 0 : index
    %6 = vector.load %arg4[%c0_5, %c0_6, %c0_7] : memref<4x1x8xf32, #tpu.memory_space<vmem>>, vector<4x1x8xf32>
    %7 = vector.broadcast %6 : vector<4x1x8xf32> to vector<4x8x8xf32>
    %8 = arith.addf %5, %7 : vector<4x8x8xf32>
    %c0_8 = arith.constant 0 : index
    %c0_9 = arith.constant 0 : index
    %c0_10 = arith.constant 0 : index
    %9 = vector.load %arg5[%c0_8, %c0_9, %c0_10] : memref<4x32x8xbf16, #tpu.memory_space<vmem>>, vector<4x32x8xbf16>
    "tpu.trace_start"() <{level = 10 : i32, message = "hnd,hde->hne"}> : () -> ()
    %cst_11 = arith.constant dense<0.000000e+00> : vector<4x8x8xf32>
    %10 = tpu.matmul %3, %9, %cst_11 {dimension_numbers = #tpu.dot_dimension_numbers<[2], [1], [1], [2], [0, 0, 0, 1, 1, 2], [0], [0]>} : vector<4x8x32xbf16>, vector<4x32x8xbf16>, vector<4x8x8xf32> -> vector<4x8x8xf32>
    "tpu.trace_stop"() : () -> ()
    %c0_12 = arith.constant 0 : index
    %c0_13 = arith.constant 0 : index
    %c0_14 = arith.constant 0 : index
    %11 = vector.load %arg6[%c0_12, %c0_13, %c0_14] : memref<4x32x8xbf16, #tpu.memory_space<vmem>>, vector<4x32x8xbf16>
    "tpu.trace_start"() <{level = 10 : i32, message = "hnd,hde->hne"}> : () -> ()
    %cst_15 = arith.constant dense<0.000000e+00> : vector<4x8x8xf32>
    %12 = tpu.matmul %3, %11, %cst_15 {dimension_numbers = #tpu.dot_dimension_numbers<[2], [1], [1], [2], [0, 0, 0, 1, 1, 2], [0], [0]>} : vector<4x8x32xbf16>, vector<4x32x8xbf16>, vector<4x8x8xf32> -> vector<4x8x8xf32>
    "tpu.trace_stop"() : () -> ()
    %c0_16 = arith.constant 0 : index
    %c0_17 = arith.constant 0 : index
    %c0_18 = arith.constant 0 : index
    %13 = vector.load %arg7[%c0_16, %c0_17, %c0_18] : memref<4x32x8xbf16, #tpu.memory_space<vmem>>, vector<4x32x8xbf16>
    "tpu.trace_start"() <{level = 10 : i32, message = "hnd,hde->hne"}> : () -> ()
    %cst_19 = arith.constant dense<0.000000e+00> : vector<4x8x8xf32>
    %14 = tpu.matmul %3, %13, %cst_19 {dimension_numbers = #tpu.dot_dimension_numbers<[2], [1], [1], [2], [0, 0, 0, 1, 1, 2], [0], [0]>} : vector<4x8x32xbf16>, vector<4x32x8xbf16>, vector<4x8x8xf32> -> vector<4x8x8xf32>
    "tpu.trace_stop"() : () -> ()
    %c0_20 = arith.constant 0 : index
    %c0_21 = arith.constant 0 : index
    %c0_22 = arith.constant 0 : index
    %15 = vector.load %arg8[%c0_20, %c0_21, %c0_22] : memref<4x1x8xf32, #tpu.memory_space<vmem>>, vector<4x1x8xf32>
    %16 = vector.broadcast %15 : vector<4x1x8xf32> to vector<4x8x8xf32>
    %17 = arith.addf %14, %16 : vector<4x8x8xf32>
    %18 = arith.truncf %8 : vector<4x8x8xf32> to vector<4x8x8xbf16>
    %19 = arith.truncf %10 : vector<4x8x8xf32> to vector<4x8x8xbf16>
    "tpu.trace_start"() <{level = 10 : i32, message = "hqd,hkd->hqk"}> : () -> ()
    %cst_23 = arith.constant dense<0.000000e+00> : vector<4x8x8xf32>
    %20 = tpu.matmul %18, %19, %cst_23 {dimension_numbers = #tpu.dot_dimension_numbers<[2], [2], [1], [1], [0, 0, 0, 1, 1, 1], [0], [0]>} : vector<4x8x8xbf16>, vector<4x8x8xbf16>, vector<4x8x8xf32> -> vector<4x8x8xf32>
    "tpu.trace_stop"() : () -> ()
    %c0_24 = arith.constant 0 : index
    %c0_25 = arith.constant 0 : index
    %c0_26 = arith.constant 0 : index
    %21 = vector.load %arg2[%c0_24, %c0_25, %c0_26] : memref<1x1x8xf32, #tpu.memory_space<vmem>>, vector<1x1x8xf32>
    %22 = vector.broadcast %21 : vector<1x1x8xf32> to vector<4x8x8xf32>
    %23 = arith.addf %20, %22 : vector<4x8x8xf32>
    %cst_27 = arith.constant dense<0xFF800000> : vector<4x8xf32>
    %24 = vector.multi_reduction <maximumf>, %23, %cst_27 [2] : vector<4x8x8xf32> to vector<4x8xf32>
    %25 = vector.shape_cast %24 : vector<4x8xf32> to vector<4x8x1xf32>
    %26 = vector.broadcast %25 : vector<4x8x1xf32> to vector<4x8x8xf32>
    %27 = arith.subf %23, %26 : vector<4x8x8xf32>
    %28 = math.exp %27 : vector<4x8x8xf32>
    %cst_28 = arith.constant dense<0.000000e+00> : vector<4x8xf32>
    %29 = vector.multi_reduction <add>, %28, %cst_28 [2] : vector<4x8x8xf32> to vector<4x8xf32>
    %30 = vector.shape_cast %29 : vector<4x8xf32> to vector<4x8x1xf32>
    %31 = vector.broadcast %30 : vector<4x8x1xf32> to vector<4x8x8xf32>
    %32 = arith.divf %28, %31 : vector<4x8x8xf32>
    %33 = arith.truncf %32 : vector<4x8x8xf32> to vector<4x8x8xbf16>
    %34 = arith.truncf %12 : vector<4x8x8xf32> to vector<4x8x8xbf16>
    "tpu.trace_start"() <{level = 10 : i32, message = "hqk,hkd->hqd"}> : () -> ()
    %cst_29 = arith.constant dense<0.000000e+00> : vector<4x8x8xf32>
    %35 = tpu.matmul %33, %34, %cst_29 {dimension_numbers = #tpu.dot_dimension_numbers<[2], [1], [1], [2], [0, 0, 0, 1, 1, 2], [0], [0]>} : vector<4x8x8xbf16>, vector<4x8x8xbf16>, vector<4x8x8xf32> -> vector<4x8x8xf32>
    "tpu.trace_stop"() : () -> ()
    %36 = arith.negf %17 : vector<4x8x8xf32>
    %37 = math.exp %36 : vector<4x8x8xf32>
    %cst_30 = arith.constant 1.000000e+00 : f32
    %38 = vector.broadcast %cst_30 : f32 to vector<4x8x8xf32>
    %39 = arith.addf %38, %37 : vector<4x8x8xf32>
    %40 = arith.divf %38, %39 : vector<4x8x8xf32>
    %41 = arith.mulf %35, %40 : vector<4x8x8xf32>
    %42 = arith.truncf %41 : vector<4x8x8xf32> to vector<4x8x8xbf16>
    %c0_31 = arith.constant 0 : index
    %c0_32 = arith.constant 0 : index
    %c0_33 = arith.constant 0 : index
    %43 = vector.load %arg9[%c0_31, %c0_32, %c0_33] : memref<4x8x128xbf16, #tpu.memory_space<vmem>>, vector<4x8x128xbf16>
    "tpu.trace_start"() <{level = 10 : i32, message = "hnd,hdo->hno"}> : () -> ()
    %cst_34 = arith.constant dense<0.000000e+00> : vector<4x8x128xf32>
    %44 = tpu.matmul %42, %43, %cst_34 {dimension_numbers = #tpu.dot_dimension_numbers<[2], [1], [1], [2], [0, 0, 0, 1, 1, 2], [0], [0]>} : vector<4x8x8xbf16>, vector<4x8x128xbf16>, vector<4x8x128xf32> -> vector<4x8x128xf32>
    "tpu.trace_stop"() : () -> ()
    %cst_35 = arith.constant dense<0.000000e+00> : vector<8x128xf32>
    %45 = vector.multi_reduction <add>, %44, %cst_35 [0] : vector<4x8x128xf32> to vector<8x128xf32>
    %c0_36 = arith.constant 0 : index
    %c0_37 = arith.constant 0 : index
    %c0_38 = arith.constant 0 : index
    %46 = vector.load %arg10[%c0_36, %c0_37, %c0_38] : memref<1x8x128xf32, #tpu.memory_space<vmem>>, vector<1x8x128xf32>
    %47 = vector.shape_cast %46 : vector<1x8x128xf32> to vector<8x128xf32>
    %48 = vector.shape_cast %45 : vector<8x128xf32> to vector<1x8x128xf32>
    tpu.vector_store %arg10[%c0_36, %c0_37, %c0_38], %48 {strides = array<i32>} : memref<1x8x128xf32, #tpu.memory_space<vmem>>, vector<1x8x128xf32>,
    return
  }
  func.func @transform_0(%arg0: i32) -> (i32, i32, i32) {
    %c0_i32 = arith.constant 0 : i32
    %c0_i32_0 = arith.constant 0 : i32
    %c0_i32_1 = arith.constant 0 : i32
    return %arg0, %c0_i32, %c0_i32_0 : i32, i32, i32
  }
  func.func @transform_1(%arg0: i32) -> (i32, i32, i32) {
    %c0_i32 = arith.constant 0 : i32
    %c0_i32_0 = arith.constant 0 : i32
    %c0_i32_1 = arith.constant 0 : i32
    return %arg0, %c0_i32, %c0_i32_0 : i32, i32, i32
  }
  func.func @transform_2(%arg0: i32) -> (i32, i32, i32) {
    %c0_i32 = arith.constant 0 : i32
    %c0_i32_0 = arith.constant 0 : i32
    %c0_i32_1 = arith.constant 0 : i32
    %c0_i32_2 = arith.constant 0 : i32
    return %c0_i32, %c0_i32_0, %c0_i32_1 : i32, i32, i32
  }
  func.func @transform_3(%arg0: i32) -> (i32, i32, i32) {
    %c0_i32 = arith.constant 0 : i32
    %c0_i32_0 = arith.constant 0 : i32
    %c0_i32_1 = arith.constant 0 : i32
    %c0_i32_2 = arith.constant 0 : i32
    return %c0_i32, %c0_i32_0, %c0_i32_1 : i32, i32, i32
  }
  func.func @transform_4(%arg0: i32) -> (i32, i32, i32) {
    %c0_i32 = arith.constant 0 : i32
    %c0_i32_0 = arith.constant 0 : i32
    %c0_i32_1 = arith.constant 0 : i32
    %c0_i32_2 = arith.constant 0 : i32
    return %c0_i32, %c0_i32_0, %c0_i32_1 : i32, i32, i32
  }
  func.func @transform_5(%arg0: i32) -> (i32, i32, i32) {
    %c0_i32 = arith.constant 0 : i32
    %c0_i32_0 = arith.constant 0 : i32
    %c0_i32_1 = arith.constant 0 : i32
    %c0_i32_2 = arith.constant 0 : i32
    return %c0_i32, %c0_i32_0, %c0_i32_1 : i32, i32, i32
  }
  func.func @transform_6(%arg0: i32) -> (i32, i32, i32) {
    %c0_i32 = arith.constant 0 : i32
    %c0_i32_0 = arith.constant 0 : i32
    %c0_i32_1 = arith.constant 0 : i32
    %c0_i32_2 = arith.constant 0 : i32
    return %c0_i32, %c0_i32_0, %c0_i32_1 : i32, i32, i32
  }
  func.func @transform_7(%arg0: i32) -> (i32, i32, i32) {
    %c0_i32 = arith.constant 0 : i32
    %c0_i32_0 = arith.constant 0 : i32
    %c0_i32_1 = arith.constant 0 : i32
    %c0_i32_2 = arith.constant 0 : i32
    return %c0_i32, %c0_i32_0, %c0_i32_1 : i32, i32, i32
  }
  func.func @transform_8(%arg0: i32) -> (i32, i32, i32) {
    %c0_i32 = arith.constant 0 : i32
    %c0_i32_0 = arith.constant 0 : i32
    %c0_i32_1 = arith.constant 0 : i32
    %c0_i32_2 = arith.constant 0 : i32
    return %c0_i32, %c0_i32_0, %c0_i32_1 : i32, i32, i32
  }
  func.func @transform_9(%arg0: i32) -> (i32, i32, i32) {
    %c0_i32 = arith.constant 0 : i32
    %c0_i32_0 = arith.constant 0 : i32
    %c0_i32_1 = arith.constant 0 : i32
    return %arg0, %c0_i32, %c0_i32_0 : i32, i32, i32
  }
}

</mosaic_0001>

<llo_original>
// kernel: tpu_custom_call.1
$region0: #{tpu_custom_call.1}
  #allocation0 [shape = 'u32[]', space=smem, size = 0x4, offset = 0x4, fixed_abs, tag = 'smem constant byte address 0x4 - core index']
  #allocation1 [shape = 'u32[144,128]{1,0:T(1,128)}', space=vmem, size = 0x12000, scoped, tag = 'internal scratch']
  %s0 = inlined_call_operand.vmem [shape: bf16[2,8,32], index: 0, kind: input, shape index: {}]
  %s1 = inlined_call_operand.vmem [shape: f32[2,1,8], index: 1, kind: input, shape index: {}]
  %s2 = inlined_call_operand.vmem [shape: bf16[4,32,8], index: 2, kind: input, shape index: {}]
  %s3 = inlined_call_operand.vmem [shape: f32[4,1,8], index: 3, kind: input, shape index: {}]
  %s4 = inlined_call_operand.vmem [shape: bf16[4,32,8], index: 4, kind: input, shape index: {}]
  %s5 = inlined_call_operand.vmem [shape: bf16[4,32,8], index: 5, kind: input, shape index: {}]
  %s6 = inlined_call_operand.vmem [shape: bf16[4,32,8], index: 6, kind: input, shape index: {}]
  %s7 = inlined_call_operand.vmem [shape: f32[4,1,8], index: 7, kind: input, shape index: {}]
  %s8 = inlined_call_operand.vmem [shape: bf16[4,8,128], index: 8, kind: input, shape index: {}]
  %s9 = inlined_call_operand.hbm [shape: f32[2,8,128], index: 9, kind: output, shape index: {}]
  %s10 = sld [smem:[#allocation0]]
  $region69: #{tpu_custom_call.1} parent=0
    _
  %s12 = ssub.s32 1, %s10
  %s13 = scalar_select 0, %s12, %s10
  $region1: #{tpu_custom_call.1} parent=0
    #allocation2 [shape = 'u8[8192]{0}', space=vmem, size = 0x2000, scoped, tag = 'output window, operand 0']
    #allocation3 [shape = 's32[2]{0}', space=sflag, size = 0x8, scoped, tag = 'scoped memory for tpu_custom_call.1']
    %14 = vsyncpa [#allocation3], 0
    %s15 = scalar_lea.sflag [#allocation3], 1
    %16 = vsyncpa %s15, 0
    loop: start=0, step=1, limit=4
    $region2: #{tpu_custom_call.1} parent=1 // loop_pre_header
      _
    $region3: #{tpu_custom_call.1} parent=1 // loop_header
      %s18 = sphi 0, %s22
      %p19 = scmp.ge.s32.totalorder %s18, 4
      %s28 = sphi 0, %s30
      %s31 = sphi 0, %s28
      %s32 = sphi 0, %s31
      %s48 = sphi 0, %s32
      %s54 = sphi 0, %s56
      %s57 = sphi 0, %s54
      %s58 = sphi 0, %s57
      %s74 = sphi 0, %s58
      %s78 = sphi 0, %s78
      %s80 = sphi 0, %s78
      %s81 = sphi 0, %s80
      %s95 = sphi 0, %s81
      %s99 = sphi 0, %s99
      %s101 = sphi 0, %s99
      %s102 = sphi 0, %s101
      %s116 = sphi 0, %s102
      %s120 = sphi 0, %s120
      %s122 = sphi 0, %s120
      %s123 = sphi 0, %s122
      %s137 = sphi 0, %s123
      %s141 = sphi 0, %s141
      %s143 = sphi 0, %s141
      %s144 = sphi 0, %s143
      %s158 = sphi 0, %s144
      %s162 = sphi 0, %s162
      %s164 = sphi 0, %s162
      %s165 = sphi 0, %s164
      %s179 = sphi 0, %s165
      %s183 = sphi 0, %s183
      %s185 = sphi 0, %s183
      %s186 = sphi 0, %s185
      %s200 = sphi 0, %s186
      %s204 = sphi 0, %s204
      %s206 = sphi 0, %s204
      %s207 = sphi 0, %s206
      %s221 = sphi 0, %s207
      %s227 = sphi 0, %s229
      %s230 = sphi 0, %s227
      %s231 = sphi 0, %s230
      %s247 = sphi 0, %s231
    $region4: #{tpu_custom_call.1} parent=1 // loop_header_branch
      %21 = sbr.rel (%p19) target = $region8
    $region5: #{tpu_custom_call.1} parent=1 // loop_body
      %s23 = ssub.s32 %s18, 1
      %s24 = ssub.s32 %s18, 2
      %s25 = sadd.s32 %s18, 1
      %s26 = ssub.s32 %s18, %s25
      %p27 = scmp.eq.s32.totalorder %s26, 0
      %s29 = sadd.s32 %s28, 1
      %s30 = scalar_select %p27, %s28, %s29
      %p33 = pneg %p27
      %p34 = scmp.eq.s32.totalorder %s18, 1
      %p35 = por %p33, %p34
      %p36 = scmp.ne.s32.totalorder %s28, %s31
      %p37 = scmp.eq.s32.totalorder %s18, 0
      %p38 = por %p36, %p37
      %p39 = scmp.ne.s32.totalorder %s28, %s31
      %p40 = scmp.eq.s32.totalorder %s23, 1
      %p41 = por %p39, %p40
      %p42 = scmp.ne.s32.totalorder %s31, %s32
      %p43 = scmp.eq.s32.totalorder %s23, 0
      %p44 = por %p42, %p43
      %p45 = scmp.ne.s32.totalorder %s31, %s32
      %p46 = scmp.eq.s32.totalorder %s24, 1
      %p47 = por %p45, %p46
      %p49 = scmp.ne.s32.totalorder %s32, %s48
      %p50 = scmp.eq.s32.totalorder %s24, 0
      %p51 = por %p49, %p50
      %s52 = ssub.s32 %s18, %s25
      %p53 = scmp.eq.s32.totalorder %s52, 0
      %s55 = sadd.s32 %s54, 1
      %s56 = scalar_select %p53, %s54, %s55
      %p59 = pneg %p53
      %p60 = scmp.eq.s32.totalorder %s18, 1
      %p61 = por %p59, %p60
      %p62 = scmp.ne.s32.totalorder %s54, %s57
      %p63 = scmp.eq.s32.totalorder %s18, 0
      %p64 = por %p62, %p63
      %p65 = scmp.ne.s32.totalorder %s54, %s57
      %p66 = scmp.eq.s32.totalorder %s23, 1
      %p67 = por %p65, %p66
      %p68 = scmp.ne.s32.totalorder %s57, %s58
      %p69 = scmp.eq.s32.totalorder %s23, 0
      %p70 = por %p68, %p69
      %p71 = scmp.ne.s32.totalorder %s57, %s58
      %p72 = scmp.eq.s32.totalorder %s24, 1
      %p73 = por %p71, %p72
      %p75 = scmp.ne.s32.totalorder %s58, %s74
      %p76 = scmp.eq.s32.totalorder %s24, 0
      %p77 = por %p75, %p76
      %s79 = sadd.s32 %s78, 1
      %p82 = scmp.eq.s32.totalorder %s18, 1
      %p83 = scmp.ne.s32.totalorder %s78, %s80
      %p84 = scmp.eq.s32.totalorder %s18, 0
      %p85 = por %p83, %p84
      %p86 = scmp.ne.s32.totalorder %s78, %s80
      %p87 = scmp.eq.s32.totalorder %s23, 1
      %p88 = por %p86, %p87
      %p89 = scmp.ne.s32.totalorder %s80, %s81
      %p90 = scmp.eq.s32.totalorder %s23, 0
      %p91 = por %p89, %p90
      %p92 = scmp.ne.s32.totalorder %s80, %s81
      %p93 = scmp.eq.s32.totalorder %s24, 1
      %p94 = por %p92, %p93
      %p96 = scmp.ne.s32.totalorder %s81, %s95
      %p97 = scmp.eq.s32.totalorder %s24, 0
      %p98 = por %p96, %p97
      %s100 = sadd.s32 %s99, 1
      %p103 = scmp.eq.s32.totalorder %s18, 1
      %p104 = scmp.ne.s32.totalorder %s99, %s101
      %p105 = scmp.eq.s32.totalorder %s18, 0
      %p106 = por %p104, %p105
      %p107 = scmp.ne.s32.totalorder %s99, %s101
      %p108 = scmp.eq.s32.totalorder %s23, 1
      %p109 = por %p107, %p108
      %p110 = scmp.ne.s32.totalorder %s101, %s102
      %p111 = scmp.eq.s32.totalorder %s23, 0
      %p112 = por %p110, %p111
      %p113 = scmp.ne.s32.totalorder %s101, %s102
      %p114 = scmp.eq.s32.totalorder %s24, 1
      %p115 = por %p113, %p114
      %p117 = scmp.ne.s32.totalorder %s102, %s116
      %p118 = scmp.eq.s32.totalorder %s24, 0
      %p119 = por %p117, %p118
      %s121 = sadd.s32 %s120, 1
      %p124 = scmp.eq.s32.totalorder %s18, 1
      %p125 = scmp.ne.s32.totalorder %s120, %s122
      %p126 = scmp.eq.s32.totalorder %s18, 0
      %p127 = por %p125, %p126
      %p128 = scmp.ne.s32.totalorder %s120, %s122
      %p129 = scmp.eq.s32.totalorder %s23, 1
      %p130 = por %p128, %p129
      %p131 = scmp.ne.s32.totalorder %s122, %s123
      %p132 = scmp.eq.s32.totalorder %s23, 0
      %p133 = por %p131, %p132
      %p134 = scmp.ne.s32.totalorder %s122, %s123
      %p135 = scmp.eq.s32.totalorder %s24, 1
      %p136 = por %p134, %p135
      %p138 = scmp.ne.s32.totalorder %s123, %s137
      %p139 = scmp.eq.s32.totalorder %s24, 0
      %p140 = por %p138, %p139
      %s142 = sadd.s32 %s141, 1
      %p145 = scmp.eq.s32.totalorder %s18, 1
      %p146 = scmp.ne.s32.totalorder %s141, %s143
      %p147 = scmp.eq.s32.totalorder %s18, 0
      %p148 = por %p146, %p147
      %p149 = scmp.ne.s32.totalorder %s141, %s143
      %p150 = scmp.eq.s32.totalorder %s23, 1
      %p151 = por %p149, %p150
      %p152 = scmp.ne.s32.totalorder %s143, %s144
      %p153 = scmp.eq.s32.totalorder %s23, 0
      %p154 = por %p152, %p153
      %p155 = scmp.ne.s32.totalorder %s143, %s144
      %p156 = scmp.eq.s32.totalorder %s24, 1
      %p157 = por %p155, %p156
      %p159 = scmp.ne.s32.totalorder %s144, %s158
      %p160 = scmp.eq.s32.totalorder %s24, 0
      %p161 = por %p159, %p160
      %s163 = sadd.s32 %s162, 1
      %p166 = scmp.eq.s32.totalorder %s18, 1
      %p167 = scmp.ne.s32.totalorder %s162, %s164
      %p168 = scmp.eq.s32.totalorder %s18, 0
      %p169 = por %p167, %p168
      %p170 = scmp.ne.s32.totalorder %s162, %s164
      %p171 = scmp.eq.s32.totalorder %s23, 1
      %p172 = por %p170, %p171
      %p173 = scmp.ne.s32.totalorder %s164, %s165
      %p174 = scmp.eq.s32.totalorder %s23, 0
      %p175 = por %p173, %p174
      %p176 = scmp.ne.s32.totalorder %s164, %s165
      %p177 = scmp.eq.s32.totalorder %s24, 1
      %p178 = por %p176, %p177
      %p180 = scmp.ne.s32.totalorder %s165, %s179
      %p181 = scmp.eq.s32.totalorder %s24, 0
      %p182 = por %p180, %p181
      %s184 = sadd.s32 %s183, 1
      %p187 = scmp.eq.s32.totalorder %s18, 1
      %p188 = scmp.ne.s32.totalorder %s183, %s185
      %p189 = scmp.eq.s32.totalorder %s18, 0
      %p190 = por %p188, %p189
      %p191 = scmp.ne.s32.totalorder %s183, %s185
      %p192 = scmp.eq.s32.totalorder %s23, 1
      %p193 = por %p191, %p192
      %p194 = scmp.ne.s32.totalorder %s185, %s186
      %p195 = scmp.eq.s32.totalorder %s23, 0
      %p196 = por %p194, %p195
      %p197 = scmp.ne.s32.totalorder %s185, %s186
      %p198 = scmp.eq.s32.totalorder %s24, 1
      %p199 = por %p197, %p198
      %p201 = scmp.ne.s32.totalorder %s186, %s200
      %p202 = scmp.eq.s32.totalorder %s24, 0
      %p203 = por %p201, %p202
      %s205 = sadd.s32 %s204, 1
      %p208 = scmp.eq.s32.totalorder %s18, 1
      %p209 = scmp.ne.s32.totalorder %s204, %s206
      %p210 = scmp.eq.s32.totalorder %s18, 0
      %p211 = por %p209, %p210
      %p212 = scmp.ne.s32.totalorder %s204, %s206
      %p213 = scmp.eq.s32.totalorder %s23, 1
      %p214 = por %p212, %p213
      %p215 = scmp.ne.s32.totalorder %s206, %s207
      %p216 = scmp.eq.s32.totalorder %s23, 0
      %p217 = por %p215, %p216
      %p218 = scmp.ne.s32.totalorder %s206, %s207
      %p219 = scmp.eq.s32.totalorder %s24, 1
      %p220 = por %p218, %p219
      %p222 = scmp.ne.s32.totalorder %s207, %s221
      %p223 = scmp.eq.s32.totalorder %s24, 0
      %p224 = por %p222, %p223
      %s225 = ssub.s32 %s18, %s25
      %p226 = scmp.eq.s32.totalorder %s225, 0
      %s228 = sadd.s32 %s227, 1
      %s229 = scalar_select %p226, %s227, %s228
      %p232 = pneg %p226
      %p233 = scmp.eq.s32.totalorder %s18, 1
      %p234 = por %p232, %p233
      %p235 = scmp.ne.s32.totalorder %s227, %s230
      %p236 = scmp.eq.s32.totalorder %s18, 0
      %p237 = por %p235, %p236
      %p238 = scmp.ne.s32.totalorder %s227, %s230
      %p239 = scmp.eq.s32.totalorder %s23, 1
      %p240 = por %p238, %p239
      %p241 = scmp.ne.s32.totalorder %s230, %s231
      %p242 = scmp.eq.s32.totalorder %s23, 0
      %p243 = por %p241, %p242
      %p244 = scmp.ne.s32.totalorder %s230, %s231
      %p245 = scmp.eq.s32.totalorder %s24, 1
      %p246 = por %p244, %p245
      %p248 = scmp.ne.s32.totalorder %s231, %s247
      %p249 = scmp.eq.s32.totalorder %s24, 0
      %p250 = por %p248, %p249
      %p251 = scmp.le.s32.totalorder 1, %s18
      %p252 = scmp.lt.s32.totalorder %s18, 3
      %p253 = pnand %p251, %p252
      %p254 = pneg %p253
      // Predicated region
      $region9: #{tpu_custom_call.1} parent=5 // pred_check
        _
      $region10: #{tpu_custom_call.1} parent=5 // pred_check_branch
        %256 = sbr.rel (%p253) target = $region12
      $region11: #{tpu_custom_call.1} parent=5 // pred_region
        %s257 = ssub.s32 %s18, 1
        // Predicated region
        $region13: #{tpu_custom_call.1} parent=11 // pred_check
          %p258 = pneg %p91
        $region14: #{tpu_custom_call.1} parent=11 // pred_check_branch
          %260 = sbr.rel (%p258) target = $region16
        $region15: #{tpu_custom_call.1} parent=11 // pred_region
          _
        $region16: #{tpu_custom_call.1} parent=11 // pred_fallthru
          _
        // Predicated region
        $region17: #{tpu_custom_call.1} parent=11 // pred_check
          %p261 = pneg %p112
        $region18: #{tpu_custom_call.1} parent=11 // pred_check_branch
          %263 = sbr.rel (%p261) target = $region20
        $region19: #{tpu_custom_call.1} parent=11 // pred_region
          _
        $region20: #{tpu_custom_call.1} parent=11 // pred_fallthru
          _
        // Predicated region
        $region21: #{tpu_custom_call.1} parent=11 // pred_check
          %p264 = pneg %p133
        $region22: #{tpu_custom_call.1} parent=11 // pred_check_branch
          %266 = sbr.rel (%p264) target = $region24
        $region23: #{tpu_custom_call.1} parent=11 // pred_region
          _
        $region24: #{tpu_custom_call.1} parent=11 // pred_fallthru
          _
        // Predicated region
        $region25: #{tpu_custom_call.1} parent=11 // pred_check
          %p267 = pneg %p154
        $region26: #{tpu_custom_call.1} parent=11 // pred_check_branch
          %269 = sbr.rel (%p267) target = $region28
        $region27: #{tpu_custom_call.1} parent=11 // pred_region
          _
        $region28: #{tpu_custom_call.1} parent=11 // pred_fallthru
          _
        // Predicated region
        $region29: #{tpu_custom_call.1} parent=11 // pred_check
          %p270 = pneg %p175
        $region30: #{tpu_custom_call.1} parent=11 // pred_check_branch
          %272 = sbr.rel (%p270) target = $region32
        $region31: #{tpu_custom_call.1} parent=11 // pred_region
          _
        $region32: #{tpu_custom_call.1} parent=11 // pred_fallthru
          _
        // Predicated region
        $region33: #{tpu_custom_call.1} parent=11 // pred_check
          %p273 = pneg %p196
        $region34: #{tpu_custom_call.1} parent=11 // pred_check_branch
          %275 = sbr.rel (%p273) target = $region36
        $region35: #{tpu_custom_call.1} parent=11 // pred_region
          _
        $region36: #{tpu_custom_call.1} parent=11 // pred_fallthru
          _
        // Predicated region
        $region37: #{tpu_custom_call.1} parent=11 // pred_check
          %p276 = pneg %p217
        $region38: #{tpu_custom_call.1} parent=11 // pred_check_branch
          %278 = sbr.rel (%p276) target = $region40
        $region39: #{tpu_custom_call.1} parent=11 // pred_region
          _
        $region40: #{tpu_custom_call.1} parent=11 // pred_fallthru
          _
      $region12: #{tpu_custom_call.1} parent=5 // pred_fallthru
        _
      %p279 = scmp.lt.s32.totalorder %s18, 2
      // Predicated region
      $region41: #{tpu_custom_call.1} parent=5 // pred_check
        %p280 = pneg %p279
      $region42: #{tpu_custom_call.1} parent=5 // pred_check_branch
        %282 = sbr.rel (%p280) target = $region44
      $region43: #{tpu_custom_call.1} parent=5 // pred_region
        // Predicated region
        $region45: #{tpu_custom_call.1} parent=43 // pred_check
          %p283 = pneg %p38
        $region46: #{tpu_custom_call.1} parent=43 // pred_check_branch
          %285 = sbr.rel (%p283) target = $region48
        $region47: #{tpu_custom_call.1} parent=43 // pred_region
          %p286 = scmp.lt.s32.totalorder %s18, 1
          %s287 = scalar_select %p286, %s18, 1
          %s288 = smul.addr %s287, 4
          %s289 = scalar_lea.vmem %s0, %s288
        $region48: #{tpu_custom_call.1} parent=43 // pred_fallthru
          _
        // Predicated region
        $region49: #{tpu_custom_call.1} parent=43 // pred_check
          %p290 = pneg %p64
        $region50: #{tpu_custom_call.1} parent=43 // pred_check_branch
          %292 = sbr.rel (%p290) target = $region52
        $region51: #{tpu_custom_call.1} parent=43 // pred_region
          %p293 = scmp.lt.s32.totalorder %s18, 1
          %s294 = scalar_select %p293, %s18, 1
          %s295 = scalar_lea.vmem %s1, %s294
        $region52: #{tpu_custom_call.1} parent=43 // pred_fallthru
          _
      $region44: #{tpu_custom_call.1} parent=5 // pred_fallthru
        _
      %p296 = scmp.le.s32.totalorder 1, %s18
      %p297 = scmp.lt.s32.totalorder %s18, 3
      %p298 = pnand %p296, %p297
      %p299 = pneg %p298
      // Predicated region
      $region53: #{tpu_custom_call.1} parent=5 // pred_check
        _
      $region54: #{tpu_custom_call.1} parent=5 // pred_check_branch
        %301 = sbr.rel (%p298) target = $region56
      $region55: #{tpu_custom_call.1} parent=5 // pred_region
        %s302 = ssub.s32 %s18, 1
        %p303 = scmp.lt.s32.totalorder %s23, 1
        %s304 = scalar_select %p303, %s23, 1
        %s305 = smul.addr %s304, 4
        %s306 = scalar_lea.vmem %s0, %s305
        %p307 = pneg %p44
        %p308 = pneg %p41
        %p309 = scmp.lt.s32.totalorder %s23, 1
        %s310 = scalar_select %p309, %s23, 1
        %s311 = scalar_lea.vmem %s1, %s310
        %p312 = pneg %p70
        %p313 = pneg %p67
        %p314 = pneg %p91
        %p315 = pneg %p88
        %p316 = pneg %p112
        %p317 = pneg %p109
        %p318 = pneg %p133
        %p319 = pneg %p130
        %p320 = pneg %p154
        %p321 = pneg %p151
        %p322 = pneg %p175
        %p323 = pneg %p172
        %p324 = pneg %p196
        %p325 = pneg %p193
        %p326 = pneg %p217
        %p327 = pneg %p214
        %p328 = pneg %p243
        %p329 = pneg %p240
        %s330 = sand.u32 %s230, 1
        %s331 = scalar_lea.sflag [#allocation3], %s330
        %s332 = sand.u32 %s230, 1
        %s333 = smul.addr %s332, 8
        %s334 = scalar_lea.vmem [#allocation2], %s333
        %p335 = scmp.lt.s32.totalorder %s23, 1
        %s336 = scalar_select %p335, %s23, 1
        %s337 = smul.addr %s336, 4
        %s338 = scalar_lea.vmem %s0, %s337
        %p339 = scmp.lt.s32.totalorder %s23, 1
        %s340 = scalar_select %p339, %s23, 1
        %s341 = scalar_lea.vmem %s1, %s340
        %v343 = vld [vmem:[%s338] sm:$0xf]
        %v344 = vld [vmem:[%s2] sm:$0xf]
        %v345 = vld [vmem:[%s2 + $0x4] sm:$0xf]
        %v346 = vld [vmem:[%s2 + $0x8] sm:$0xf]
        %v347 = vld [vmem:[%s2 + $0xc] sm:$0xf]
        %v348 = vld [vmem:[%s2 + $0x10] sm:$0xf]
        %v349 = vld [vmem:[%s2 + $0x14] sm:$0xf]
        %v350 = vld [vmem:[%s2 + $0x18] sm:$0xf]
        %v351 = vld [vmem:[%s2 + $0x1c] sm:$0xf]
        %v352 = vld [vmem:[%s2 + $0x20] sm:$0xf]
        %v353 = vld [vmem:[%s2 + $0x24] sm:$0xf]
        %v354 = vld [vmem:[%s2 + $0x28] sm:$0xf]
        %v355 = vld [vmem:[%s2 + $0x2c] sm:$0xf]
        %v356 = vld [vmem:[%s2 + $0x30] sm:$0xf]
        %v357 = vld [vmem:[%s2 + $0x34] sm:$0xf]
        %v358 = vld [vmem:[%s2 + $0x38] sm:$0xf]
        %v359 = vld [vmem:[%s2 + $0x3c] sm:$0xf]
        %v360 = vld [vmem:[%s3] sm:$0x1]
        %v361 = vld [vmem:[%s3 + $0x1] sm:$0x1]
        %v362 = vld [vmem:[%s3 + $0x2] sm:$0x1]
        %v363 = vld [vmem:[%s3 + $0x3] sm:$0x1]
        %v368 = vlaneseq
        %v369 = vshrl.u32 %v368, 7
        %v370 = vsub.s32 0, %v369
        %v371 = vrot.slane %v360, %v370
        %v372 = vlaneseq
        %v373 = vshrl.u32 %v372, 7
        %v374 = vsub.s32 0, %v373
        %v375 = vrot.slane %v361, %v374
        %v376 = vlaneseq
        %v377 = vshrl.u32 %v376, 7
        %v378 = vsub.s32 0, %v377
        %v379 = vrot.slane %v362, %v378
        %v380 = vlaneseq
        %v381 = vshrl.u32 %v380, 7
        %v382 = vsub.s32 0, %v381
        %v383 = vrot.slane %v363, %v382
        %v392 = vunpack.c.l.b16 %v344
        %v393 = vunpack.c.l.b16 %v345
        %v394 = vunpack.c.l.b16 %v346
        %v395 = vunpack.c.l.b16 %v347
        %v396 = vpack.c.b16 %v393, %v392
        %v397 = vpack.c.b16 %v395, %v394
        %vm400 = vcmask 261120
        %v402 = vsel %vm400, %v343, 0
        %404 = vmatprep.subr.bf16.mxu0 0
        %405 = vmatpush1.bf16.msra.mxu0 0
        %406 = vmatprep.subr.bf16.mxu0 0
        %407 = vmatpush1.bf16.msra.mxu0 0
        %408 = vmatprep.subr.bf16.mxu0 0
        %409 = vmatpush1.bf16.msra.mxu0 0
        %410 = vmatprep.subr.bf16.mxu0 0
        %411 = vmatpush1.bf16.msra.mxu0 0
        %412 = vmatprep.subr.bf16.mxu0 0
        %413 = vmatpush1.bf16.msra.mxu0 0
        %414 = vmatprep.subr.bf16.mxu0 0
        %415 = vmatpush1.bf16.msra.mxu0 0
        %416 = vmatprep.subr.bf16.mxu0 0
        %417 = vmatpush1.bf16.msra.mxu0 %v397
        %418 = vmatprep.subr.bf16.mxu0 0
        %419 = vmatpush1.bf16.msra.mxu0 %v396
        %420 = vmatprep.subr.bf16.mxu0 0
        %421 = vmatpush2.bf16.msra.mxu0 0
        %422 = vmatprep.subr.bf16.mxu0 0
        %423 = vmatpush2.bf16.msra.mxu0 0
        %424 = vmatprep.subr.bf16.mxu0 0
        %425 = vmatpush2.bf16.msra.mxu0 0
        %426 = vmatprep.subr.bf16.mxu0 0
        %427 = vmatpush2.bf16.msra.mxu0 0
        %428 = vmatprep.subr.bf16.mxu0 0
        %429 = vmatpush2.bf16.msra.mxu0 0
        %430 = vmatprep.subr.bf16.mxu0 0
        %431 = vmatpush2.bf16.msra.mxu0 0
        %432 = vmatprep.subr.bf16.mxu0 0
        %433 = vmatpush2.bf16.msra.mxu0 0
        %434 = vmatprep.subr.bf16.mxu0 0
        %435 = vmatpush2.bf16.msra.mxu0 0
        %436 = vmatprep.mubr.bf16.mxu0 0
        %437 = vmatmul.mubr.bf16.gmra.mxu0 %v402
        %v438 = vpop.f32.mrf.mxu0
        %v439 = vadd.f32 %v371, %v438
        %v440 = vpop.f32.mrf.mxu0
        %v441 = vpop.f32.mrf.mxu0
        %v442 = vpop.f32.mrf.mxu0
        %443 = vdwg.mxu0
        %v448 = vunpack.c.l.b16 %v348
        %v449 = vunpack.c.l.b16 %v349
        %v450 = vunpack.c.l.b16 %v350
        %v451 = vunpack.c.l.b16 %v351
        %v452 = vpack.c.b16 %v449, %v448
        %v453 = vpack.c.b16 %v451, %v450
        %456 = vmatprep.subr.bf16.mxu0 0
        %457 = vmatpush1.bf16.msra.mxu0 0
        %458 = vmatprep.subr.bf16.mxu0 0
        %459 = vmatpush1.bf16.msra.mxu0 0
        %460 = vmatprep.subr.bf16.mxu0 0
        %461 = vmatpush1.bf16.msra.mxu0 0
        %462 = vmatprep.subr.bf16.mxu0 0
        %463 = vmatpush1.bf16.msra.mxu0 0
        %464 = vmatprep.subr.bf16.mxu0 0
        %465 = vmatpush1.bf16.msra.mxu0 0
        %466 = vmatprep.subr.bf16.mxu0 0
        %467 = vmatpush1.bf16.msra.mxu0 0
        %468 = vmatprep.subr.bf16.mxu0 0
        %469 = vmatpush1.bf16.msra.mxu0 %v453
        %470 = vmatprep.subr.bf16.mxu0 0
        %471 = vmatpush1.bf16.msra.mxu0 %v452
        %472 = vmatprep.subr.bf16.mxu0 0
        %473 = vmatpush2.bf16.msra.mxu0 0
        %474 = vmatprep.subr.bf16.mxu0 0
        %475 = vmatpush2.bf16.msra.mxu0 0
        %476 = vmatprep.subr.bf16.mxu0 0
        %477 = vmatpush2.bf16.msra.mxu0 0
        %478 = vmatprep.subr.bf16.mxu0 0
        %479 = vmatpush2.bf16.msra.mxu0 0
        %480 = vmatprep.subr.bf16.mxu0 0
        %481 = vmatpush2.bf16.msra.mxu0 0
        %482 = vmatprep.subr.bf16.mxu0 0
        %483 = vmatpush2.bf16.msra.mxu0 0
        %484 = vmatprep.subr.bf16.mxu0 0
        %485 = vmatpush2.bf16.msra.mxu0 0
        %486 = vmatprep.subr.bf16.mxu0 0
        %487 = vmatpush2.bf16.msra.mxu0 0
        %488 = vmatprep.mubr.bf16.mxu0 0
        %489 = vmatmul.mubr.bf16.gmra.mxu0 %v402
        %v490 = vpop.f32.mrf.mxu0
        %v491 = vadd.f32 %v375, %v490
        %v492 = vpop.f32.mrf.mxu0
        %v493 = vpop.f32.mrf.mxu0
        %v494 = vpop.f32.mrf.mxu0
        %495 = vdwg.mxu0
        %v500 = vunpack.c.l.b16 %v352
        %v501 = vunpack.c.l.b16 %v353
        %v502 = vunpack.c.l.b16 %v354
        %v503 = vunpack.c.l.b16 %v355
        %v504 = vpack.c.b16 %v501, %v500
        %v505 = vpack.c.b16 %v503, %v502
        %508 = vmatprep.subr.bf16.mxu0 0
        %509 = vmatpush1.bf16.msra.mxu0 0
        %510 = vmatprep.subr.bf16.mxu0 0
        %511 = vmatpush1.bf16.msra.mxu0 0
        %512 = vmatprep.subr.bf16.mxu0 0
        %513 = vmatpush1.bf16.msra.mxu0 0
        %514 = vmatprep.subr.bf16.mxu0 0
        %515 = vmatpush1.bf16.msra.mxu0 0
        %516 = vmatprep.subr.bf16.mxu0 0
        %517 = vmatpush1.bf16.msra.mxu0 0
        %518 = vmatprep.subr.bf16.mxu0 0
        %519 = vmatpush1.bf16.msra.mxu0 0
        %520 = vmatprep.subr.bf16.mxu0 0
        %521 = vmatpush1.bf16.msra.mxu0 %v505
        %522 = vmatprep.subr.bf16.mxu0 0
        %523 = vmatpush1.bf16.msra.mxu0 %v504
        %524 = vmatprep.subr.bf16.mxu0 0
        %525 = vmatpush2.bf16.msra.mxu0 0
        %526 = vmatprep.subr.bf16.mxu0 0
        %527 = vmatpush2.bf16.msra.mxu0 0
        %528 = vmatprep.subr.bf16.mxu0 0
        %529 = vmatpush2.bf16.msra.mxu0 0
        %530 = vmatprep.subr.bf16.mxu0 0
        %531 = vmatpush2.bf16.msra.mxu0 0
        %532 = vmatprep.subr.bf16.mxu0 0
        %533 = vmatpush2.bf16.msra.mxu0 0
        %534 = vmatprep.subr.bf16.mxu0 0
        %535 = vmatpush2.bf16.msra.mxu0 0
        %536 = vmatprep.subr.bf16.mxu0 0
        %537 = vmatpush2.bf16.msra.mxu0 0
        %538 = vmatprep.subr.bf16.mxu0 0
        %539 = vmatpush2.bf16.msra.mxu0 0
        %540 = vmatprep.mubr.bf16.mxu0 0
        %541 = vmatmul.mubr.bf16.gmra.mxu0 %v402
        %v542 = vpop.f32.mrf.mxu0
        %v543 = vadd.f32 %v379, %v542
        %v544 = vpop.f32.mrf.mxu0
        %v545 = vpop.f32.mrf.mxu0
        %v546 = vpop.f32.mrf.mxu0
        %547 = vdwg.mxu0
        %v552 = vunpack.c.l.b16 %v356
        %v553 = vunpack.c.l.b16 %v357
        %v554 = vunpack.c.l.b16 %v358
        %v555 = vunpack.c.l.b16 %v359
        %v556 = vpack.c.b16 %v553, %v552
        %v557 = vpack.c.b16 %v555, %v554
        %560 = vmatprep.subr.bf16.mxu0 0
        %561 = vmatpush1.bf16.msra.mxu0 0
        %562 = vmatprep.subr.bf16.mxu0 0
        %563 = vmatpush1.bf16.msra.mxu0 0
        %564 = vmatprep.subr.bf16.mxu0 0
        %565 = vmatpush1.bf16.msra.mxu0 0
        %566 = vmatprep.subr.bf16.mxu0 0
        %567 = vmatpush1.bf16.msra.mxu0 0
        %568 = vmatprep.subr.bf16.mxu0 0
        %569 = vmatpush1.bf16.msra.mxu0 0
        %570 = vmatprep.subr.bf16.mxu0 0
        %571 = vmatpush1.bf16.msra.mxu0 0
        %572 = vmatprep.subr.bf16.mxu0 0
        %573 = vmatpush1.bf16.msra.mxu0 %v557
        %574 = vmatprep.subr.bf16.mxu0 0
        %575 = vmatpush1.bf16.msra.mxu0 %v556
        %576 = vmatprep.subr.bf16.mxu0 0
        %577 = vmatpush2.bf16.msra.mxu0 0
        %578 = vmatprep.subr.bf16.mxu0 0
        %579 = vmatpush2.bf16.msra.mxu0 0
        %580 = vmatprep.subr.bf16.mxu0 0
        %581 = vmatpush2.bf16.msra.mxu0 0
        %582 = vmatprep.subr.bf16.mxu0 0
        %583 = vmatpush2.bf16.msra.mxu0 0
        %584 = vmatprep.subr.bf16.mxu0 0
        %585 = vmatpush2.bf16.msra.mxu0 0
        %586 = vmatprep.subr.bf16.mxu0 0
        %587 = vmatpush2.bf16.msra.mxu0 0
        %588 = vmatprep.subr.bf16.mxu0 0
        %589 = vmatpush2.bf16.msra.mxu0 0
        %590 = vmatprep.subr.bf16.mxu0 0
        %591 = vmatpush2.bf16.msra.mxu0 0
        %592 = vmatprep.mubr.bf16.mxu0 0
        %593 = vmatmul.mubr.bf16.gmra.mxu0 %v402
        %v594 = vpop.f32.mrf.mxu0
        %v595 = vadd.f32 %v383, %v594
        %v596 = vpop.f32.mrf.mxu0
        %v597 = vpop.f32.mrf.mxu0
        %v598 = vpop.f32.mrf.mxu0
        %599 = vdwg.mxu0
        %v600 = vld [vmem:[%s4] sm:$0xf]
        %v601 = vld [vmem:[%s4 + $0x4] sm:$0xf]
        %v602 = vld [vmem:[%s4 + $0x8] sm:$0xf]
        %v603 = vld [vmem:[%s4 + $0xc] sm:$0xf]
        %v604 = vld [vmem:[%s4 + $0x10] sm:$0xf]
        %v605 = vld [vmem:[%s4 + $0x14] sm:$0xf]
        %v606 = vld [vmem:[%s4 + $0x18] sm:$0xf]
        %v607 = vld [vmem:[%s4 + $0x1c] sm:$0xf]
        %v608 = vld [vmem:[%s4 + $0x20] sm:$0xf]
        %v609 = vld [vmem:[%s4 + $0x24] sm:$0xf]
        %v610 = vld [vmem:[%s4 + $0x28] sm:$0xf]
        %v611 = vld [vmem:[%s4 + $0x2c] sm:$0xf]
        %v612 = vld [vmem:[%s4 + $0x30] sm:$0xf]
        %v613 = vld [vmem:[%s4 + $0x34] sm:$0xf]
        %v614 = vld [vmem:[%s4 + $0x38] sm:$0xf]
        %v615 = vld [vmem:[%s4 + $0x3c] sm:$0xf]
        %v620 = vunpack.c.l.b16 %v600
        %v621 = vunpack.c.l.b16 %v601
        %v622 = vunpack.c.l.b16 %v602
        %v623 = vunpack.c.l.b16 %v603
        %v624 = vpack.c.b16 %v621, %v620
        %v625 = vpack.c.b16 %v623, %v622
        %628 = vmatprep.subr.bf16.mxu0 0
        %629 = vmatpush1.bf16.msra.mxu0 0
        %630 = vmatprep.subr.bf16.mxu0 0
        %631 = vmatpush1.bf16.msra.mxu0 0
        %632 = vmatprep.subr.bf16.mxu0 0
        %633 = vmatpush1.bf16.msra.mxu0 0
        %634 = vmatprep.subr.bf16.mxu0 0
        %635 = vmatpush1.bf16.msra.mxu0 0
        %636 = vmatprep.subr.bf16.mxu0 0
        %637 = vmatpush1.bf16.msra.mxu0 0
        %638 = vmatprep.subr.bf16.mxu0 0
        %639 = vmatpush1.bf16.msra.mxu0 0
        %640 = vmatprep.subr.bf16.mxu0 0
        %641 = vmatpush1.bf16.msra.mxu0 %v625
        %642 = vmatprep.subr.bf16.mxu0 0
        %643 = vmatpush1.bf16.msra.mxu0 %v624
        %644 = vmatprep.subr.bf16.mxu0 0
        %645 = vmatpush2.bf16.msra.mxu0 0
        %646 = vmatprep.subr.bf16.mxu0 0
        %647 = vmatpush2.bf16.msra.mxu0 0
        %648 = vmatprep.subr.bf16.mxu0 0
        %649 = vmatpush2.bf16.msra.mxu0 0
        %650 = vmatprep.subr.bf16.mxu0 0
        %651 = vmatpush2.bf16.msra.mxu0 0
        %652 = vmatprep.subr.bf16.mxu0 0
        %653 = vmatpush2.bf16.msra.mxu0 0
        %654 = vmatprep.subr.bf16.mxu0 0
        %655 = vmatpush2.bf16.msra.mxu0 0
        %656 = vmatprep.subr.bf16.mxu0 0
        %657 = vmatpush2.bf16.msra.mxu0 0
        %658 = vmatprep.subr.bf16.mxu0 0
        %659 = vmatpush2.bf16.msra.mxu0 0
        %660 = vmatprep.mubr.bf16.mxu0 0
        %661 = vmatmul.mubr.bf16.gmra.mxu0 %v402
        %v662 = vpop.f32.mrf.mxu0
        %v663 = vadd.f32 0.0, %v662
        %v664 = vpop.f32.mrf.mxu0
        %v665 = vpop.f32.mrf.mxu0
        %v666 = vpop.f32.mrf.mxu0
        %667 = vdwg.mxu0
        %v672 = vunpack.c.l.b16 %v604
        %v673 = vunpack.c.l.b16 %v605
        %v674 = vunpack.c.l.b16 %v606
        %v675 = vunpack.c.l.b16 %v607
        %v676 = vpack.c.b16 %v673, %v672
        %v677 = vpack.c.b16 %v675, %v674
        %680 = vmatprep.subr.bf16.mxu0 0
        %681 = vmatpush1.bf16.msra.mxu0 0
        %682 = vmatprep.subr.bf16.mxu0 0
        %683 = vmatpush1.bf16.msra.mxu0 0
        %684 = vmatprep.subr.bf16.mxu0 0
        %685 = vmatpush1.bf16.msra.mxu0 0
        %686 = vmatprep.subr.bf16.mxu0 0
        %687 = vmatpush1.bf16.msra.mxu0 0
        %688 = vmatprep.subr.bf16.mxu0 0
        %689 = vmatpush1.bf16.msra.mxu0 0
        %690 = vmatprep.subr.bf16.mxu0 0
        %691 = vmatpush1.bf16.msra.mxu0 0
        %692 = vmatprep.subr.bf16.mxu0 0
        %693 = vmatpush1.bf16.msra.mxu0 %v677
        %694 = vmatprep.subr.bf16.mxu0 0
        %695 = vmatpush1.bf16.msra.mxu0 %v676
        %696 = vmatprep.subr.bf16.mxu0 0
        %697 = vmatpush2.bf16.msra.mxu0 0
        %698 = vmatprep.subr.bf16.mxu0 0
        %699 = vmatpush2.bf16.msra.mxu0 0
        %700 = vmatprep.subr.bf16.mxu0 0
        %701 = vmatpush2.bf16.msra.mxu0 0
        %702 = vmatprep.subr.bf16.mxu0 0
        %703 = vmatpush2.bf16.msra.mxu0 0
        %704 = vmatprep.subr.bf16.mxu0 0
        %705 = vmatpush2.bf16.msra.mxu0 0
        %706 = vmatprep.subr.bf16.mxu0 0
        %707 = vmatpush2.bf16.msra.mxu0 0
        %708 = vmatprep.subr.bf16.mxu0 0
        %709 = vmatpush2.bf16.msra.mxu0 0
        %710 = vmatprep.subr.bf16.mxu0 0
        %711 = vmatpush2.bf16.msra.mxu0 0
        %712 = vmatprep.mubr.bf16.mxu0 0
        %713 = vmatmul.mubr.bf16.gmra.mxu0 %v402
        %v714 = vpop.f32.mrf.mxu0
        %v715 = vadd.f32 0.0, %v714
        %v716 = vpop.f32.mrf.mxu0
        %v717 = vpop.f32.mrf.mxu0
        %v718 = vpop.f32.mrf.mxu0
        %719 = vdwg.mxu0
        %v724 = vunpack.c.l.b16 %v608
        %v725 = vunpack.c.l.b16 %v609
        %v726 = vunpack.c.l.b16 %v610
        %v727 = vunpack.c.l.b16 %v611
        %v728 = vpack.c.b16 %v725, %v724
        %v729 = vpack.c.b16 %v727, %v726
        %732 = vmatprep.subr.bf16.mxu0 0
        %733 = vmatpush1.bf16.msra.mxu0 0
        %734 = vmatprep.subr.bf16.mxu0 0
        %735 = vmatpush1.bf16.msra.mxu0 0
        %736 = vmatprep.subr.bf16.mxu0 0
        %737 = vmatpush1.bf16.msra.mxu0 0
        %738 = vmatprep.subr.bf16.mxu0 0
        %739 = vmatpush1.bf16.msra.mxu0 0
        %740 = vmatprep.subr.bf16.mxu0 0
        %741 = vmatpush1.bf16.msra.mxu0 0
        %742 = vmatprep.subr.bf16.mxu0 0
        %743 = vmatpush1.bf16.msra.mxu0 0
        %744 = vmatprep.subr.bf16.mxu0 0
        %745 = vmatpush1.bf16.msra.mxu0 %v729
        %746 = vmatprep.subr.bf16.mxu0 0
        %747 = vmatpush1.bf16.msra.mxu0 %v728
        %748 = vmatprep.subr.bf16.mxu0 0
        %749 = vmatpush2.bf16.msra.mxu0 0
        %750 = vmatprep.subr.bf16.mxu0 0
        %751 = vmatpush2.bf16.msra.mxu0 0
        %752 = vmatprep.subr.bf16.mxu0 0
        %753 = vmatpush2.bf16.msra.mxu0 0
        %754 = vmatprep.subr.bf16.mxu0 0
        %755 = vmatpush2.bf16.msra.mxu0 0
        %756 = vmatprep.subr.bf16.mxu0 0
        %757 = vmatpush2.bf16.msra.mxu0 0
        %758 = vmatprep.subr.bf16.mxu0 0
        %759 = vmatpush2.bf16.msra.mxu0 0
        %760 = vmatprep.subr.bf16.mxu0 0
        %761 = vmatpush2.bf16.msra.mxu0 0
        %762 = vmatprep.subr.bf16.mxu0 0
        %763 = vmatpush2.bf16.msra.mxu0 0
        %764 = vmatprep.mubr.bf16.mxu0 0
        %765 = vmatmul.mubr.bf16.gmra.mxu0 %v402
        %v766 = vpop.f32.mrf.mxu0
        %v767 = vadd.f32 0.0, %v766
        %v768 = vpop.f32.mrf.mxu0
        %v769 = vpop.f32.mrf.mxu0
        %v770 = vpop.f32.mrf.mxu0
        %771 = vdwg.mxu0
        %v776 = vunpack.c.l.b16 %v612
        %v777 = vunpack.c.l.b16 %v613
        %v778 = vunpack.c.l.b16 %v614
        %v779 = vunpack.c.l.b16 %v615
        %v780 = vpack.c.b16 %v777, %v776
        %v781 = vpack.c.b16 %v779, %v778
        %784 = vmatprep.subr.bf16.mxu0 0
        %785 = vmatpush1.bf16.msra.mxu0 0
        %786 = vmatprep.subr.bf16.mxu0 0
        %787 = vmatpush1.bf16.msra.mxu0 0
        %788 = vmatprep.subr.bf16.mxu0 0
        %789 = vmatpush1.bf16.msra.mxu0 0
        %790 = vmatprep.subr.bf16.mxu0 0
        %791 = vmatpush1.bf16.msra.mxu0 0
        %792 = vmatprep.subr.bf16.mxu0 0
        %793 = vmatpush1.bf16.msra.mxu0 0
        %794 = vmatprep.subr.bf16.mxu0 0
        %795 = vmatpush1.bf16.msra.mxu0 0
        %796 = vmatprep.subr.bf16.mxu0 0
        %797 = vmatpush1.bf16.msra.mxu0 %v781
        %798 = vmatprep.subr.bf16.mxu0 0
        %799 = vmatpush1.bf16.msra.mxu0 %v780
        %800 = vmatprep.subr.bf16.mxu0 0
        %801 = vmatpush2.bf16.msra.mxu0 0
        %802 = vmatprep.subr.bf16.mxu0 0
        %803 = vmatpush2.bf16.msra.mxu0 0
        %804 = vmatprep.subr.bf16.mxu0 0
        %805 = vmatpush2.bf16.msra.mxu0 0
        %806 = vmatprep.subr.bf16.mxu0 0
        %807 = vmatpush2.bf16.msra.mxu0 0
        %808 = vmatprep.subr.bf16.mxu0 0
        %809 = vmatpush2.bf16.msra.mxu0 0
        %810 = vmatprep.subr.bf16.mxu0 0
        %811 = vmatpush2.bf16.msra.mxu0 0
        %812 = vmatprep.subr.bf16.mxu0 0
        %813 = vmatpush2.bf16.msra.mxu0 0
        %814 = vmatprep.subr.bf16.mxu0 0
        %815 = vmatpush2.bf16.msra.mxu0 0
        %816 = vmatprep.mubr.bf16.mxu0 0
        %817 = vmatmul.mubr.bf16.gmra.mxu0 %v402
        %v818 = vpop.f32.mrf.mxu0
        %v819 = vadd.f32 0.0, %v818
        %v820 = vpop.f32.mrf.mxu0
        %v821 = vpop.f32.mrf.mxu0
        %v822 = vpop.f32.mrf.mxu0
        %823 = vdwg.mxu0
        %v824 = vld [vmem:[%s5] sm:$0xf]
        %v825 = vld [vmem:[%s5 + $0x4] sm:$0xf]
        %v826 = vld [vmem:[%s5 + $0x8] sm:$0xf]
        %v827 = vld [vmem:[%s5 + $0xc] sm:$0xf]
        %v828 = vld [vmem:[%s5 + $0x10] sm:$0xf]
        %v829 = vld [vmem:[%s5 + $0x14] sm:$0xf]
        %v830 = vld [vmem:[%s5 + $0x18] sm:$0xf]
        %v831 = vld [vmem:[%s5 + $0x1c] sm:$0xf]
        %v832 = vld [vmem:[%s5 + $0x20] sm:$0xf]
        %v833 = vld [vmem:[%s5 + $0x24] sm:$0xf]
        %v834 = vld [vmem:[%s5 + $0x28] sm:$0xf]
        %v835 = vld [vmem:[%s5 + $0x2c] sm:$0xf]
        %v836 = vld [vmem:[%s5 + $0x30] sm:$0xf]
        %v837 = vld [vmem:[%s5 + $0x34] sm:$0xf]
        %v838 = vld [vmem:[%s5 + $0x38] sm:$0xf]
        %v839 = vld [vmem:[%s5 + $0x3c] sm:$0xf]
        %v844 = vunpack.c.l.b16 %v824
        %v845 = vunpack.c.l.b16 %v825
        %v846 = vunpack.c.l.b16 %v826
        %v847 = vunpack.c.l.b16 %v827
        %v848 = vpack.c.b16 %v845, %v844
        %v849 = vpack.c.b16 %v847, %v846
        %852 = vmatprep.subr.bf16.mxu0 0
        %853 = vmatpush1.bf16.msra.mxu0 0
        %854 = vmatprep.subr.bf16.mxu0 0
        %855 = vmatpush1.bf16.msra.mxu0 0
        %856 = vmatprep.subr.bf16.mxu0 0
        %857 = vmatpush1.bf16.msra.mxu0 0
        %858 = vmatprep.subr.bf16.mxu0 0
        %859 = vmatpush1.bf16.msra.mxu0 0
        %860 = vmatprep.subr.bf16.mxu0 0
        %861 = vmatpush1.bf16.msra.mxu0 0
        %862 = vmatprep.subr.bf16.mxu0 0
        %863 = vmatpush1.bf16.msra.mxu0 0
        %864 = vmatprep.subr.bf16.mxu0 0
        %865 = vmatpush1.bf16.msra.mxu0 %v849
        %866 = vmatprep.subr.bf16.mxu0 0
        %867 = vmatpush1.bf16.msra.mxu0 %v848
        %868 = vmatprep.subr.bf16.mxu0 0
        %869 = vmatpush2.bf16.msra.mxu0 0
        %870 = vmatprep.subr.bf16.mxu0 0
        %871 = vmatpush2.bf16.msra.mxu0 0
        %872 = vmatprep.subr.bf16.mxu0 0
        %873 = vmatpush2.bf16.msra.mxu0 0
        %874 = vmatprep.subr.bf16.mxu0 0
        %875 = vmatpush2.bf16.msra.mxu0 0
        %876 = vmatprep.subr.bf16.mxu0 0
        %877 = vmatpush2.bf16.msra.mxu0 0
        %878 = vmatprep.subr.bf16.mxu0 0
        %879 = vmatpush2.bf16.msra.mxu0 0
        %880 = vmatprep.subr.bf16.mxu0 0
        %881 = vmatpush2.bf16.msra.mxu0 0
        %882 = vmatprep.subr.bf16.mxu0 0
        %883 = vmatpush2.bf16.msra.mxu0 0
        %884 = vmatprep.mubr.bf16.mxu0 0
        %885 = vmatmul.mubr.bf16.gmra.mxu0 %v402
        %v886 = vpop.f32.mrf.mxu0
        %v887 = vadd.f32 0.0, %v886
        %v888 = vpop.f32.mrf.mxu0
        %v889 = vpop.f32.mrf.mxu0
        %v890 = vpop.f32.mrf.mxu0
        %891 = vdwg.mxu0
        %v896 = vunpack.c.l.b16 %v828
        %v897 = vunpack.c.l.b16 %v829
        %v898 = vunpack.c.l.b16 %v830
        %v899 = vunpack.c.l.b16 %v831
        %v900 = vpack.c.b16 %v897, %v896
        %v901 = vpack.c.b16 %v899, %v898
        %904 = vmatprep.subr.bf16.mxu0 0
        %905 = vmatpush1.bf16.msra.mxu0 0
        %906 = vmatprep.subr.bf16.mxu0 0
        %907 = vmatpush1.bf16.msra.mxu0 0
        %908 = vmatprep.subr.bf16.mxu0 0
        %909 = vmatpush1.bf16.msra.mxu0 0
        %910 = vmatprep.subr.bf16.mxu0 0
        %911 = vmatpush1.bf16.msra.mxu0 0
        %912 = vmatprep.subr.bf16.mxu0 0
        %913 = vmatpush1.bf16.msra.mxu0 0
        %914 = vmatprep.subr.bf16.mxu0 0
        %915 = vmatpush1.bf16.msra.mxu0 0
        %916 = vmatprep.subr.bf16.mxu0 0
        %917 = vmatpush1.bf16.msra.mxu0 %v901
        %918 = vmatprep.subr.bf16.mxu0 0
        %919 = vmatpush1.bf16.msra.mxu0 %v900
        %920 = vmatprep.subr.bf16.mxu0 0
        %921 = vmatpush2.bf16.msra.mxu0 0
        %922 = vmatprep.subr.bf16.mxu0 0
        %923 = vmatpush2.bf16.msra.mxu0 0
        %924 = vmatprep.subr.bf16.mxu0 0
        %925 = vmatpush2.bf16.msra.mxu0 0
        %926 = vmatprep.subr.bf16.mxu0 0
        %927 = vmatpush2.bf16.msra.mxu0 0
        %928 = vmatprep.subr.bf16.mxu0 0
        %929 = vmatpush2.bf16.msra.mxu0 0
        %930 = vmatprep.subr.bf16.mxu0 0
        %931 = vmatpush2.bf16.msra.mxu0 0
        %932 = vmatprep.subr.bf16.mxu0 0
        %933 = vmatpush2.bf16.msra.mxu0 0
        %934 = vmatprep.subr.bf16.mxu0 0
        %935 = vmatpush2.bf16.msra.mxu0 0
        %936 = vmatprep.mubr.bf16.mxu0 0
        %937 = vmatmul.mubr.bf16.gmra.mxu0 %v402
        %v938 = vpop.f32.mrf.mxu0
        %v939 = vadd.f32 0.0, %v938
        %v940 = vpop.f32.mrf.mxu0
        %v941 = vpop.f32.mrf.mxu0
        %v942 = vpop.f32.mrf.mxu0
        %943 = vdwg.mxu0
        %v948 = vunpack.c.l.b16 %v832
        %v949 = vunpack.c.l.b16 %v833
        %v950 = vunpack.c.l.b16 %v834
        %v951 = vunpack.c.l.b16 %v835
        %v952 = vpack.c.b16 %v949, %v948
        %v953 = vpack.c.b16 %v951, %v950
        %956 = vmatprep.subr.bf16.mxu0 0
        %957 = vmatpush1.bf16.msra.mxu0 0
        %958 = vmatprep.subr.bf16.mxu0 0
        %959 = vmatpush1.bf16.msra.mxu0 0
        %960 = vmatprep.subr.bf16.mxu0 0
        %961 = vmatpush1.bf16.msra.mxu0 0
        %962 = vmatprep.subr.bf16.mxu0 0
        %963 = vmatpush1.bf16.msra.mxu0 0
        %964 = vmatprep.subr.bf16.mxu0 0
        %965 = vmatpush1.bf16.msra.mxu0 0
        %966 = vmatprep.subr.bf16.mxu0 0
        %967 = vmatpush1.bf16.msra.mxu0 0
        %968 = vmatprep.subr.bf16.mxu0 0
        %969 = vmatpush1.bf16.msra.mxu0 %v953
        %970 = vmatprep.subr.bf16.mxu0 0
        %971 = vmatpush1.bf16.msra.mxu0 %v952
        %972 = vmatprep.subr.bf16.mxu0 0
        %973 = vmatpush2.bf16.msra.mxu0 0
        %974 = vmatprep.subr.bf16.mxu0 0
        %975 = vmatpush2.bf16.msra.mxu0 0
        %976 = vmatprep.subr.bf16.mxu0 0
        %977 = vmatpush2.bf16.msra.mxu0 0
        %978 = vmatprep.subr.bf16.mxu0 0
        %979 = vmatpush2.bf16.msra.mxu0 0
        %980 = vmatprep.subr.bf16.mxu0 0
        %981 = vmatpush2.bf16.msra.mxu0 0
        %982 = vmatprep.subr.bf16.mxu0 0
        %983 = vmatpush2.bf16.msra.mxu0 0
        %984 = vmatprep.subr.bf16.mxu0 0
        %985 = vmatpush2.bf16.msra.mxu0 0
        %986 = vmatprep.subr.bf16.mxu0 0
        %987 = vmatpush2.bf16.msra.mxu0 0
        %988 = vmatprep.mubr.bf16.mxu0 0
        %989 = vmatmul.mubr.bf16.gmra.mxu0 %v402
        %v990 = vpop.f32.mrf.mxu0
        %v991 = vadd.f32 0.0, %v990
        %v992 = vpop.f32.mrf.mxu0
        %v993 = vpop.f32.mrf.mxu0
        %v994 = vpop.f32.mrf.mxu0
        %995 = vdwg.mxu0
        %v1000 = vunpack.c.l.b16 %v836
        %v1001 = vunpack.c.l.b16 %v837
        %v1002 = vunpack.c.l.b16 %v838
        %v1003 = vunpack.c.l.b16 %v839
        %v1004 = vpack.c.b16 %v1001, %v1000
        %v1005 = vpack.c.b16 %v1003, %v1002
        %1008 = vmatprep.subr.bf16.mxu0 0
        %1009 = vmatpush1.bf16.msra.mxu0 0
        %1010 = vmatprep.subr.bf16.mxu0 0
        %1011 = vmatpush1.bf16.msra.mxu0 0
        %1012 = vmatprep.subr.bf16.mxu0 0
        %1013 = vmatpush1.bf16.msra.mxu0 0
        %1014 = vmatprep.subr.bf16.mxu0 0
        %1015 = vmatpush1.bf16.msra.mxu0 0
        %1016 = vmatprep.subr.bf16.mxu0 0
        %1017 = vmatpush1.bf16.msra.mxu0 0
        %1018 = vmatprep.subr.bf16.mxu0 0
        %1019 = vmatpush1.bf16.msra.mxu0 0
        %1020 = vmatprep.subr.bf16.mxu0 0
        %1021 = vmatpush1.bf16.msra.mxu0 %v1005
        %1022 = vmatprep.subr.bf16.mxu0 0
        %1023 = vmatpush1.bf16.msra.mxu0 %v1004
        %1024 = vmatprep.subr.bf16.mxu0 0
        %1025 = vmatpush2.bf16.msra.mxu0 0
        %1026 = vmatprep.subr.bf16.mxu0 0
        %1027 = vmatpush2.bf16.msra.mxu0 0
        %1028 = vmatprep.subr.bf16.mxu0 0
        %1029 = vmatpush2.bf16.msra.mxu0 0
        %1030 = vmatprep.subr.bf16.mxu0 0
        %1031 = vmatpush2.bf16.msra.mxu0 0
        %1032 = vmatprep.subr.bf16.mxu0 0
        %1033 = vmatpush2.bf16.msra.mxu0 0
        %1034 = vmatprep.subr.bf16.mxu0 0
        %1035 = vmatpush2.bf16.msra.mxu0 0
        %1036 = vmatprep.subr.bf16.mxu0 0
        %1037 = vmatpush2.bf16.msra.mxu0 0
        %1038 = vmatprep.subr.bf16.mxu0 0
        %1039 = vmatpush2.bf16.msra.mxu0 0
        %1040 = vmatprep.mubr.bf16.mxu0 0
        %1041 = vmatmul.mubr.bf16.gmra.mxu0 %v402
        %v1042 = vpop.f32.mrf.mxu0
        %v1043 = vadd.f32 0.0, %v1042
        %v1044 = vpop.f32.mrf.mxu0
        %v1045 = vpop.f32.mrf.mxu0
        %v1046 = vpop.f32.mrf.mxu0
        %1047 = vdwg.mxu0
        %v1048 = vld [vmem:[%s6] sm:$0xf]
        %v1049 = vld [vmem:[%s6 + $0x4] sm:$0xf]
        %v1050 = vld [vmem:[%s6 + $0x8] sm:$0xf]
        %v1051 = vld [vmem:[%s6 + $0xc] sm:$0xf]
        %v1052 = vld [vmem:[%s6 + $0x10] sm:$0xf]
        %v1053 = vld [vmem:[%s6 + $0x14] sm:$0xf]
        %v1054 = vld [vmem:[%s6 + $0x18] sm:$0xf]
        %v1055 = vld [vmem:[%s6 + $0x1c] sm:$0xf]
        %v1056 = vld [vmem:[%s6 + $0x20] sm:$0xf]
        %v1057 = vld [vmem:[%s6 + $0x24] sm:$0xf]
        %v1058 = vld [vmem:[%s6 + $0x28] sm:$0xf]
        %v1059 = vld [vmem:[%s6 + $0x2c] sm:$0xf]
        %v1060 = vld [vmem:[%s6 + $0x30] sm:$0xf]
        %v1061 = vld [vmem:[%s6 + $0x34] sm:$0xf]
        %v1062 = vld [vmem:[%s6 + $0x38] sm:$0xf]
        %v1063 = vld [vmem:[%s6 + $0x3c] sm:$0xf]
        %v1064 = vld [vmem:[%s7] sm:$0x1]
        %v1065 = vld [vmem:[%s7 + $0x1] sm:$0x1]
        %v1066 = vld [vmem:[%s7 + $0x2] sm:$0x1]
        %v1067 = vld [vmem:[%s7 + $0x3] sm:$0x1]
        %v1072 = vlaneseq
        %v1073 = vshrl.u32 %v1072, 7
        %v1074 = vsub.s32 0, %v1073
        %v1075 = vrot.slane %v1064, %v1074
        %v1076 = vlaneseq
        %v1077 = vshrl.u32 %v1076, 7
        %v1078 = vsub.s32 0, %v1077
        %v1079 = vrot.slane %v1065, %v1078
        %v1080 = vlaneseq
        %v1081 = vshrl.u32 %v1080, 7
        %v1082 = vsub.s32 0, %v1081
        %v1083 = vrot.slane %v1066, %v1082
        %v1084 = vlaneseq
        %v1085 = vshrl.u32 %v1084, 7
        %v1086 = vsub.s32 0, %v1085
        %v1087 = vrot.slane %v1067, %v1086
        %v1096 = vunpack.c.l.b16 %v1048
        %v1097 = vunpack.c.l.b16 %v1049
        %v1098 = vunpack.c.l.b16 %v1050
        %v1099 = vunpack.c.l.b16 %v1051
        %v1100 = vpack.c.b16 %v1097, %v1096
        %v1101 = vpack.c.b16 %v1099, %v1098
        %1104 = vmatprep.subr.bf16.mxu0 0
        %1105 = vmatpush1.bf16.msra.mxu0 0
        %1106 = vmatprep.subr.bf16.mxu0 0
        %1107 = vmatpush1.bf16.msra.mxu0 0
        %1108 = vmatprep.subr.bf16.mxu0 0
        %1109 = vmatpush1.bf16.msra.mxu0 0
        %1110 = vmatprep.subr.bf16.mxu0 0
        %1111 = vmatpush1.bf16.msra.mxu0 0
        %1112 = vmatprep.subr.bf16.mxu0 0
        %1113 = vmatpush1.bf16.msra.mxu0 0
        %1114 = vmatprep.subr.bf16.mxu0 0
        %1115 = vmatpush1.bf16.msra.mxu0 0
        %1116 = vmatprep.subr.bf16.mxu0 0
        %1117 = vmatpush1.bf16.msra.mxu0 %v1101
        %1118 = vmatprep.subr.bf16.mxu0 0
        %1119 = vmatpush1.bf16.msra.mxu0 %v1100
        %1120 = vmatprep.subr.bf16.mxu0 0
        %1121 = vmatpush2.bf16.msra.mxu0 0
        %1122 = vmatprep.subr.bf16.mxu0 0
        %1123 = vmatpush2.bf16.msra.mxu0 0
        %1124 = vmatprep.subr.bf16.mxu0 0
        %1125 = vmatpush2.bf16.msra.mxu0 0
        %1126 = vmatprep.subr.bf16.mxu0 0
        %1127 = vmatpush2.bf16.msra.mxu0 0
        %1128 = vmatprep.subr.bf16.mxu0 0
        %1129 = vmatpush2.bf16.msra.mxu0 0
        %1130 = vmatprep.subr.bf16.mxu0 0
        %1131 = vmatpush2.bf16.msra.mxu0 0
        %1132 = vmatprep.subr.bf16.mxu0 0
        %1133 = vmatpush2.bf16.msra.mxu0 0
        %1134 = vmatprep.subr.bf16.mxu0 0
        %1135 = vmatpush2.bf16.msra.mxu0 0
        %1136 = vmatprep.mubr.bf16.mxu0 0
        %1137 = vmatmul.mubr.bf16.gmra.mxu0 %v402
        %v1138 = vpop.f32.mrf.mxu0
        %v1139 = vadd.f32 %v1075, %v1138
        %v1140 = vpop.f32.mrf.mxu0
        %v1141 = vpop.f32.mrf.mxu0
        %v1142 = vpop.f32.mrf.mxu0
        %1143 = vdwg.mxu0
        %v1148 = vunpack.c.l.b16 %v1052
        %v1149 = vunpack.c.l.b16 %v1053
        %v1150 = vunpack.c.l.b16 %v1054
        %v1151 = vunpack.c.l.b16 %v1055
        %v1152 = vpack.c.b16 %v1149, %v1148
        %v1153 = vpack.c.b16 %v1151, %v1150
        %1156 = vmatprep.subr.bf16.mxu0 0
        %1157 = vmatpush1.bf16.msra.mxu0 0
        %1158 = vmatprep.subr.bf16.mxu0 0
        %1159 = vmatpush1.bf16.msra.mxu0 0
        %1160 = vmatprep.subr.bf16.mxu0 0
        %1161 = vmatpush1.bf16.msra.mxu0 0
        %1162 = vmatprep.subr.bf16.mxu0 0
        %1163 = vmatpush1.bf16.msra.mxu0 0
        %1164 = vmatprep.subr.bf16.mxu0 0
        %1165 = vmatpush1.bf16.msra.mxu0 0
        %1166 = vmatprep.subr.bf16.mxu0 0
        %1167 = vmatpush1.bf16.msra.mxu0 0
        %1168 = vmatprep.subr.bf16.mxu0 0
        %1169 = vmatpush1.bf16.msra.mxu0 %v1153
        %1170 = vmatprep.subr.bf16.mxu0 0
        %1171 = vmatpush1.bf16.msra.mxu0 %v1152
        %1172 = vmatprep.subr.bf16.mxu0 0
        %1173 = vmatpush2.bf16.msra.mxu0 0
        %1174 = vmatprep.subr.bf16.mxu0 0
        %1175 = vmatpush2.bf16.msra.mxu0 0
        %1176 = vmatprep.subr.bf16.mxu0 0
        %1177 = vmatpush2.bf16.msra.mxu0 0
        %1178 = vmatprep.subr.bf16.mxu0 0
        %1179 = vmatpush2.bf16.msra.mxu0 0
        %1180 = vmatprep.subr.bf16.mxu0 0
        %1181 = vmatpush2.bf16.msra.mxu0 0
        %1182 = vmatprep.subr.bf16.mxu0 0
        %1183 = vmatpush2.bf16.msra.mxu0 0
        %1184 = vmatprep.subr.bf16.mxu0 0
        %1185 = vmatpush2.bf16.msra.mxu0 0
        %1186 = vmatprep.subr.bf16.mxu0 0
        %1187 = vmatpush2.bf16.msra.mxu0 0
        %1188 = vmatprep.mubr.bf16.mxu0 0
        %1189 = vmatmul.mubr.bf16.gmra.mxu0 %v402
        %v1190 = vpop.f32.mrf.mxu0
        %v1191 = vadd.f32 %v1079, %v1190
        %v1192 = vpop.f32.mrf.mxu0
        %v1193 = vpop.f32.mrf.mxu0
        %v1194 = vpop.f32.mrf.mxu0
        %1195 = vdwg.mxu0
        %v1200 = vunpack.c.l.b16 %v1056
        %v1201 = vunpack.c.l.b16 %v1057
        %v1202 = vunpack.c.l.b16 %v1058
        %v1203 = vunpack.c.l.b16 %v1059
        %v1204 = vpack.c.b16 %v1201, %v1200
        %v1205 = vpack.c.b16 %v1203, %v1202
        %1208 = vmatprep.subr.bf16.mxu0 0
        %1209 = vmatpush1.bf16.msra.mxu0 0
        %1210 = vmatprep.subr.bf16.mxu0 0
        %1211 = vmatpush1.bf16.msra.mxu0 0
        %1212 = vmatprep.subr.bf16.mxu0 0
        %1213 = vmatpush1.bf16.msra.mxu0 0
        %1214 = vmatprep.subr.bf16.mxu0 0
        %1215 = vmatpush1.bf16.msra.mxu0 0
        %1216 = vmatprep.subr.bf16.mxu0 0
        %1217 = vmatpush1.bf16.msra.mxu0 0
        %1218 = vmatprep.subr.bf16.mxu0 0
        %1219 = vmatpush1.bf16.msra.mxu0 0
        %1220 = vmatprep.subr.bf16.mxu0 0
        %1221 = vmatpush1.bf16.msra.mxu0 %v1205
        %1222 = vmatprep.subr.bf16.mxu0 0
        %1223 = vmatpush1.bf16.msra.mxu0 %v1204
        %1224 = vmatprep.subr.bf16.mxu0 0
        %1225 = vmatpush2.bf16.msra.mxu0 0
        %1226 = vmatprep.subr.bf16.mxu0 0
        %1227 = vmatpush2.bf16.msra.mxu0 0
        %1228 = vmatprep.subr.bf16.mxu0 0
        %1229 = vmatpush2.bf16.msra.mxu0 0
        %1230 = vmatprep.subr.bf16.mxu0 0
        %1231 = vmatpush2.bf16.msra.mxu0 0
        %1232 = vmatprep.subr.bf16.mxu0 0
        %1233 = vmatpush2.bf16.msra.mxu0 0
        %1234 = vmatprep.subr.bf16.mxu0 0
        %1235 = vmatpush2.bf16.msra.mxu0 0
        %1236 = vmatprep.subr.bf16.mxu0 0
        %1237 = vmatpush2.bf16.msra.mxu0 0
        %1238 = vmatprep.subr.bf16.mxu0 0
        %1239 = vmatpush2.bf16.msra.mxu0 0
        %1240 = vmatprep.mubr.bf16.mxu0 0
        %1241 = vmatmul.mubr.bf16.gmra.mxu0 %v402
        %v1242 = vpop.f32.mrf.mxu0
        %v1243 = vadd.f32 %v1083, %v1242
        %v1244 = vpop.f32.mrf.mxu0
        %v1245 = vpop.f32.mrf.mxu0
        %v1246 = vpop.f32.mrf.mxu0
        %1247 = vdwg.mxu0
        %v1252 = vunpack.c.l.b16 %v1060
        %v1253 = vunpack.c.l.b16 %v1061
        %v1254 = vunpack.c.l.b16 %v1062
        %v1255 = vunpack.c.l.b16 %v1063
        %v1256 = vpack.c.b16 %v1253, %v1252
        %v1257 = vpack.c.b16 %v1255, %v1254
        %1260 = vmatprep.subr.bf16.mxu0 0
        %1261 = vmatpush1.bf16.msra.mxu0 0
        %1262 = vmatprep.subr.bf16.mxu0 0
        %1263 = vmatpush1.bf16.msra.mxu0 0
        %1264 = vmatprep.subr.bf16.mxu0 0
        %1265 = vmatpush1.bf16.msra.mxu0 0
        %1266 = vmatprep.subr.bf16.mxu0 0
        %1267 = vmatpush1.bf16.msra.mxu0 0
        %1268 = vmatprep.subr.bf16.mxu0 0
        %1269 = vmatpush1.bf16.msra.mxu0 0
        %1270 = vmatprep.subr.bf16.mxu0 0
        %1271 = vmatpush1.bf16.msra.mxu0 0
        %1272 = vmatprep.subr.bf16.mxu0 0
        %1273 = vmatpush1.bf16.msra.mxu0 %v1257
        %1274 = vmatprep.subr.bf16.mxu0 0
        %1275 = vmatpush1.bf16.msra.mxu0 %v1256
        %1276 = vmatprep.subr.bf16.mxu0 0
        %1277 = vmatpush2.bf16.msra.mxu0 0
        %1278 = vmatprep.subr.bf16.mxu0 0
        %1279 = vmatpush2.bf16.msra.mxu0 0
        %1280 = vmatprep.subr.bf16.mxu0 0
        %1281 = vmatpush2.bf16.msra.mxu0 0
        %1282 = vmatprep.subr.bf16.mxu0 0
        %1283 = vmatpush2.bf16.msra.mxu0 0
        %1284 = vmatprep.subr.bf16.mxu0 0
        %1285 = vmatpush2.bf16.msra.mxu0 0
        %1286 = vmatprep.subr.bf16.mxu0 0
        %1287 = vmatpush2.bf16.msra.mxu0 0
        %1288 = vmatprep.subr.bf16.mxu0 0
        %1289 = vmatpush2.bf16.msra.mxu0 0
        %1290 = vmatprep.subr.bf16.mxu0 0
        %1291 = vmatpush2.bf16.msra.mxu0 0
        %1292 = vmatprep.mubr.bf16.mxu0 0
        %1293 = vmatmul.mubr.bf16.gmra.mxu0 %v402
        %v1294 = vpop.f32.mrf.mxu0
        %v1295 = vadd.f32 %v1087, %v1294
        %v1296 = vpop.f32.mrf.mxu0
        %v1297 = vpop.f32.mrf.mxu0
        %v1298 = vpop.f32.mrf.mxu0
        %1299 = vdwg.mxu0
        %v1300 = vpack.c.bf16 %v439, %v439
        %v1301 = vpack.c.bf16 %v491, %v491
        %v1302 = vpack.c.bf16 %v543, %v543
        %v1303 = vpack.c.bf16 %v595, %v595
        %v1304 = vpack.c.bf16 %v663, %v663
        %v1305 = vpack.c.bf16 %v715, %v715
        %v1306 = vpack.c.bf16 %v767, %v767
        %v1307 = vpack.c.bf16 %v819, %v819
        %v1308 = vld [vmem:[%s341] sm:$0x1]
        %v1310 = vlaneseq
        %v1311 = vshrl.u32 %v1310, 7
        %v1312 = vsub.s32 0, %v1311
        %v1313 = vrot.slane %v1308, %v1312
        %vm1315 = vcmask 64512
        %v1317 = vsel %vm1315, %v1300, 0
        %v1320 = vsel %vm1315, %v1304, 0
        %1322 = vmatprep.subr.bf16.mxu0 0
        %1323 = vmatpush1.bf16.xpose.msra.mxu0 0
        %1324 = vmatprep.subr.bf16.mxu0 0
        %1325 = vmatpush1.bf16.xpose.msra.mxu0 0
        %1326 = vmatprep.subr.bf16.mxu0 0
        %1327 = vmatpush1.bf16.xpose.msra.mxu0 0
        %1328 = vmatprep.subr.bf16.mxu0 0
        %1329 = vmatpush1.bf16.xpose.msra.mxu0 0
        %1330 = vmatprep.subr.bf16.mxu0 0
        %1331 = vmatpush1.bf16.xpose.msra.mxu0 0
        %1332 = vmatprep.subr.bf16.mxu0 0
        %1333 = vmatpush1.bf16.xpose.msra.mxu0 0
        %1334 = vmatprep.subr.bf16.mxu0 0
        %1335 = vmatpush1.bf16.xpose.msra.mxu0 0
        %1336 = vmatprep.subr.bf16.mxu0 0
        %1337 = vmatpush1.bf16.xpose.msra.mxu0 %v1320
        %1338 = vmatprep.subr.bf16.mxu0 0
        %1339 = vmatpush2.bf16.xpose.msra.mxu0 0
        %1340 = vmatprep.subr.bf16.mxu0 0
        %1341 = vmatpush2.bf16.xpose.msra.mxu0 0
        %1342 = vmatprep.subr.bf16.mxu0 0
        %1343 = vmatpush2.bf16.xpose.msra.mxu0 0
        %1344 = vmatprep.subr.bf16.mxu0 0
        %1345 = vmatpush2.bf16.xpose.msra.mxu0 0
        %1346 = vmatprep.subr.bf16.mxu0 0
        %1347 = vmatpush2.bf16.xpose.msra.mxu0 0
        %1348 = vmatprep.subr.bf16.mxu0 0
        %1349 = vmatpush2.bf16.xpose.msra.mxu0 0
        %1350 = vmatprep.subr.bf16.mxu0 0
        %1351 = vmatpush2.bf16.xpose.msra.mxu0 0
        %1352 = vmatprep.subr.bf16.mxu0 0
        %1353 = vmatpush2.bf16.xpose.msra.mxu0 0
        %1354 = vmatprep.mubr.bf16.mxu0 0
        %1355 = vmatmul.mubr.bf16.gmra.mxu0 %v1317
        %v1356 = vpop.f32.mrf.mxu0
        %v1357 = vadd.f32 %v1313, %v1356
        %v1358 = vpop.f32.mrf.mxu0
        %v1359 = vpop.f32.mrf.mxu0
        %v1360 = vpop.f32.mrf.mxu0
        %1361 = vdwg.mxu0
        %v1363 = vsel %vm1315, %v1301, 0
        %v1366 = vsel %vm1315, %v1305, 0
        %1368 = vmatprep.subr.bf16.mxu0 0
        %1369 = vmatpush1.bf16.xpose.msra.mxu0 0
        %1370 = vmatprep.subr.bf16.mxu0 0
        %1371 = vmatpush1.bf16.xpose.msra.mxu0 0
        %1372 = vmatprep.subr.bf16.mxu0 0
        %1373 = vmatpush1.bf16.xpose.msra.mxu0 0
        %1374 = vmatprep.subr.bf16.mxu0 0
        %1375 = vmatpush1.bf16.xpose.msra.mxu0 0
        %1376 = vmatprep.subr.bf16.mxu0 0
        %1377 = vmatpush1.bf16.xpose.msra.mxu0 0
        %1378 = vmatprep.subr.bf16.mxu0 0
        %1379 = vmatpush1.bf16.xpose.msra.mxu0 0
        %1380 = vmatprep.subr.bf16.mxu0 0
        %1381 = vmatpush1.bf16.xpose.msra.mxu0 0
        %1382 = vmatprep.subr.bf16.mxu0 0
        %1383 = vmatpush1.bf16.xpose.msra.mxu0 %v1366
        %1384 = vmatprep.subr.bf16.mxu0 0
        %1385 = vmatpush2.bf16.xpose.msra.mxu0 0
        %1386 = vmatprep.subr.bf16.mxu0 0
        %1387 = vmatpush2.bf16.xpose.msra.mxu0 0
        %1388 = vmatprep.subr.bf16.mxu0 0
        %1389 = vmatpush2.bf16.xpose.msra.mxu0 0
        %1390 = vmatprep.subr.bf16.mxu0 0
        %1391 = vmatpush2.bf16.xpose.msra.mxu0 0
        %1392 = vmatprep.subr.bf16.mxu0 0
        %1393 = vmatpush2.bf16.xpose.msra.mxu0 0
        %1394 = vmatprep.subr.bf16.mxu0 0
        %1395 = vmatpush2.bf16.xpose.msra.mxu0 0
        %1396 = vmatprep.subr.bf16.mxu0 0
        %1397 = vmatpush2.bf16.xpose.msra.mxu0 0
        %1398 = vmatprep.subr.bf16.mxu0 0
        %1399 = vmatpush2.bf16.xpose.msra.mxu0 0
        %1400 = vmatprep.mubr.bf16.mxu0 0
        %1401 = vmatmul.mubr.bf16.gmra.mxu0 %v1363
        %v1402 = vpop.f32.mrf.mxu0
        %v1403 = vadd.f32 %v1313, %v1402
        %v1404 = vpop.f32.mrf.mxu0
        %v1405 = vpop.f32.mrf.mxu0
        %v1406 = vpop.f32.mrf.mxu0
        %1407 = vdwg.mxu0
        %v1409 = vsel %vm1315, %v1302, 0
        %v1412 = vsel %vm1315, %v1306, 0
        %1414 = vmatprep.subr.bf16.mxu0 0
        %1415 = vmatpush1.bf16.xpose.msra.mxu0 0
        %1416 = vmatprep.subr.bf16.mxu0 0
        %1417 = vmatpush1.bf16.xpose.msra.mxu0 0
        %1418 = vmatprep.subr.bf16.mxu0 0
        %1419 = vmatpush1.bf16.xpose.msra.mxu0 0
        %1420 = vmatprep.subr.bf16.mxu0 0
        %1421 = vmatpush1.bf16.xpose.msra.mxu0 0
        %1422 = vmatprep.subr.bf16.mxu0 0
        %1423 = vmatpush1.bf16.xpose.msra.mxu0 0
        %1424 = vmatprep.subr.bf16.mxu0 0
        %1425 = vmatpush1.bf16.xpose.msra.mxu0 0
        %1426 = vmatprep.subr.bf16.mxu0 0
        %1427 = vmatpush1.bf16.xpose.msra.mxu0 0
        %1428 = vmatprep.subr.bf16.mxu0 0
        %1429 = vmatpush1.bf16.xpose.msra.mxu0 %v1412
        %1430 = vmatprep.subr.bf16.mxu0 0
        %1431 = vmatpush2.bf16.xpose.msra.mxu0 0
        %1432 = vmatprep.subr.bf16.mxu0 0
        %1433 = vmatpush2.bf16.xpose.msra.mxu0 0
        %1434 = vmatprep.subr.bf16.mxu0 0
        %1435 = vmatpush2.bf16.xpose.msra.mxu0 0
        %1436 = vmatprep.subr.bf16.mxu0 0
        %1437 = vmatpush2.bf16.xpose.msra.mxu0 0
        %1438 = vmatprep.subr.bf16.mxu0 0
        %1439 = vmatpush2.bf16.xpose.msra.mxu0 0
        %1440 = vmatprep.subr.bf16.mxu0 0
        %1441 = vmatpush2.bf16.xpose.msra.mxu0 0
        %1442 = vmatprep.subr.bf16.mxu0 0
        %1443 = vmatpush2.bf16.xpose.msra.mxu0 0
        %1444 = vmatprep.subr.bf16.mxu0 0
        %1445 = vmatpush2.bf16.xpose.msra.mxu0 0
        %1446 = vmatprep.mubr.bf16.mxu0 0
        %1447 = vmatmul.mubr.bf16.gmra.mxu0 %v1409
        %v1448 = vpop.f32.mrf.mxu0
        %v1449 = vadd.f32 %v1313, %v1448
        %v1450 = vpop.f32.mrf.mxu0
        %v1451 = vpop.f32.mrf.mxu0
        %v1452 = vpop.f32.mrf.mxu0
        %1453 = vdwg.mxu0
        %v1455 = vsel %vm1315, %v1303, 0
        %v1458 = vsel %vm1315, %v1307, 0
        %1460 = vmatprep.subr.bf16.mxu0 0
        %1461 = vmatpush1.bf16.xpose.msra.mxu0 0
        %1462 = vmatprep.subr.bf16.mxu0 0
        %1463 = vmatpush1.bf16.xpose.msra.mxu0 0
        %1464 = vmatprep.subr.bf16.mxu0 0
        %1465 = vmatpush1.bf16.xpose.msra.mxu0 0
        %1466 = vmatprep.subr.bf16.mxu0 0
        %1467 = vmatpush1.bf16.xpose.msra.mxu0 0
        %1468 = vmatprep.subr.bf16.mxu0 0
        %1469 = vmatpush1.bf16.xpose.msra.mxu0 0
        %1470 = vmatprep.subr.bf16.mxu0 0
        %1471 = vmatpush1.bf16.xpose.msra.mxu0 0
        %1472 = vmatprep.subr.bf16.mxu0 0
        %1473 = vmatpush1.bf16.xpose.msra.mxu0 0
        %1474 = vmatprep.subr.bf16.mxu0 0
        %1475 = vmatpush1.bf16.xpose.msra.mxu0 %v1458
        %1476 = vmatprep.subr.bf16.mxu0 0
        %1477 = vmatpush2.bf16.xpose.msra.mxu0 0
        %1478 = vmatprep.subr.bf16.mxu0 0
        %1479 = vmatpush2.bf16.xpose.msra.mxu0 0
        %1480 = vmatprep.subr.bf16.mxu0 0
        %1481 = vmatpush2.bf16.xpose.msra.mxu0 0
        %1482 = vmatprep.subr.bf16.mxu0 0
        %1483 = vmatpush2.bf16.xpose.msra.mxu0 0
        %1484 = vmatprep.subr.bf16.mxu0 0
        %1485 = vmatpush2.bf16.xpose.msra.mxu0 0
        %1486 = vmatprep.subr.bf16.mxu0 0
        %1487 = vmatpush2.bf16.xpose.msra.mxu0 0
        %1488 = vmatprep.subr.bf16.mxu0 0
        %1489 = vmatpush2.bf16.xpose.msra.mxu0 0
        %1490 = vmatprep.subr.bf16.mxu0 0
        %1491 = vmatpush2.bf16.xpose.msra.mxu0 0
        %1492 = vmatprep.mubr.bf16.mxu0 0
        %1493 = vmatmul.mubr.bf16.gmra.mxu0 %v1455
        %v1494 = vpop.f32.mrf.mxu0
        %v1495 = vadd.f32 %v1313, %v1494
        %v1496 = vpop.f32.mrf.mxu0
        %v1497 = vpop.f32.mrf.mxu0
        %v1498 = vpop.f32.mrf.mxu0
        %1499 = vdwg.mxu0
        %v1500 = vsel %vm1315, %v1357, -inf
        %1501 = vmax.xlane.f32.xlu0 %v1500
        %v1502 = vpop.xlane.xlu0 %1501
        %v1503 = vsel %vm1315, %v1403, -inf
        %1504 = vmax.xlane.f32.xlu0 %v1503
        %v1505 = vpop.xlane.xlu0 %1504
        %v1506 = vsel %vm1315, %v1449, -inf
        %1507 = vmax.xlane.f32.xlu0 %v1506
        %v1508 = vpop.xlane.xlu0 %1507
        %v1509 = vsel %vm1315, %v1495, -inf
        %1510 = vmax.xlane.f32.xlu0 %v1509
        %v1511 = vpop.xlane.xlu0 %1510
        %v1512 = vsub.f32 %v1357, %v1502
        %v1513 = vsub.f32 %v1403, %v1505
        %v1514 = vsub.f32 %v1449, %v1508
        %v1515 = vsub.f32 %v1495, %v1511
        %v1516 = vmul.f32 %v1512, 1.442695
        %v1517 = vpow.pop %v1516
        %v1518 = vmul.f32 %v1513, 1.442695
        %v1519 = vpow.pop %v1518
        %v1520 = vmul.f32 %v1514, 1.442695
        %v1521 = vpow.pop %v1520
        %v1522 = vmul.f32 %v1515, 1.442695
        %v1523 = vpow.pop %v1522
        %v1524 = vsel %vm1315, %v1517, 0.0
        %1525 = vadd.xlane.f32.xlu0 %v1524
        %v1526 = vpop.xlane.xlu0 %1525
        %v1527 = vsel %vm1315, %v1519, 0.0
        %1528 = vadd.xlane.f32.xlu0 %v1527
        %v1529 = vpop.xlane.xlu0 %1528
        %v1530 = vsel %vm1315, %v1521, 0.0
        %1531 = vadd.xlane.f32.xlu0 %v1530
        %v1532 = vpop.xlane.xlu0 %1531
        %v1533 = vsel %vm1315, %v1523, 0.0
        %1534 = vadd.xlane.f32.xlu0 %v1533
        %v1535 = vpop.xlane.xlu0 %1534
        %v1536 = vrcp.pop %v1526
        %v1537 = vmul.f32 %v1517, %v1536
        %v1538 = vrcp.pop %v1529
        %v1539 = vmul.f32 %v1519, %v1538
        %v1540 = vrcp.pop %v1532
        %v1541 = vmul.f32 %v1521, %v1540
        %v1542 = vrcp.pop %v1535
        %v1543 = vmul.f32 %v1523, %v1542
        %v1544 = vpack.c.bf16 %v1537, %v1537
        %v1545 = vpack.c.bf16 %v1539, %v1539
        %v1546 = vpack.c.bf16 %v1541, %v1541
        %v1547 = vpack.c.bf16 %v1543, %v1543
        %v1548 = vpack.c.bf16 %v887, %v887
        %v1549 = vpack.c.bf16 %v939, %v939
        %v1550 = vpack.c.bf16 %v991, %v991
        %v1551 = vpack.c.bf16 %v1043, %v1043
        %v1553 = vsel %vm1315, %v1544, 0
        %vm1555 = vcmask 1043456
        %v1557 = vsel %vm1555, %v1548, 0
        %1559 = vmatprep.subr.bf16.mxu0 0
        %1560 = vmatpush1.bf16.msra.mxu0 0
        %1561 = vmatprep.subr.bf16.mxu0 0
        %1562 = vmatpush1.bf16.msra.mxu0 0
        %1563 = vmatprep.subr.bf16.mxu0 0
        %1564 = vmatpush1.bf16.msra.mxu0 0
        %1565 = vmatprep.subr.bf16.mxu0 0
        %1566 = vmatpush1.bf16.msra.mxu0 0
        %1567 = vmatprep.subr.bf16.mxu0 0
        %1568 = vmatpush1.bf16.msra.mxu0 0
        %1569 = vmatprep.subr.bf16.mxu0 0
        %1570 = vmatpush1.bf16.msra.mxu0 0
        %1571 = vmatprep.subr.bf16.mxu0 0
        %1572 = vmatpush1.bf16.msra.mxu0 0
        %1573 = vmatprep.subr.bf16.mxu0 0
        %1574 = vmatpush1.bf16.msra.mxu0 %v1557
        %1575 = vmatprep.subr.bf16.mxu0 0
        %1576 = vmatpush2.bf16.msra.mxu0 0
        %1577 = vmatprep.subr.bf16.mxu0 0
        %1578 = vmatpush2.bf16.msra.mxu0 0
        %1579 = vmatprep.subr.bf16.mxu0 0
        %1580 = vmatpush2.bf16.msra.mxu0 0
        %1581 = vmatprep.subr.bf16.mxu0 0
        %1582 = vmatpush2.bf16.msra.mxu0 0
        %1583 = vmatprep.subr.bf16.mxu0 0
        %1584 = vmatpush2.bf16.msra.mxu0 0
        %1585 = vmatprep.subr.bf16.mxu0 0
        %1586 = vmatpush2.bf16.msra.mxu0 0
        %1587 = vmatprep.subr.bf16.mxu0 0
        %1588 = vmatpush2.bf16.msra.mxu0 0
        %1589 = vmatprep.subr.bf16.mxu0 0
        %1590 = vmatpush2.bf16.msra.mxu0 0
        %1591 = vmatprep.mubr.bf16.mxu0 0
        %1592 = vmatmul.mubr.bf16.gmra.mxu0 %v1553
        %v1593 = vpop.f32.mrf.mxu0
        %v1594 = vadd.f32 0.0, %v1593
        %v1595 = vpop.f32.mrf.mxu0
        %v1596 = vpop.f32.mrf.mxu0
        %v1597 = vpop.f32.mrf.mxu0
        %1598 = vdwg.mxu0
        %v1600 = vsel %vm1315, %v1545, 0
        %v1603 = vsel %vm1555, %v1549, 0
        %1605 = vmatprep.subr.bf16.mxu0 0
        %1606 = vmatpush1.bf16.msra.mxu0 0
        %1607 = vmatprep.subr.bf16.mxu0 0
        %1608 = vmatpush1.bf16.msra.mxu0 0
        %1609 = vmatprep.subr.bf16.mxu0 0
        %1610 = vmatpush1.bf16.msra.mxu0 0
        %1611 = vmatprep.subr.bf16.mxu0 0
        %1612 = vmatpush1.bf16.msra.mxu0 0
        %1613 = vmatprep.subr.bf16.mxu0 0
        %1614 = vmatpush1.bf16.msra.mxu0 0
        %1615 = vmatprep.subr.bf16.mxu0 0
        %1616 = vmatpush1.bf16.msra.mxu0 0
        %1617 = vmatprep.subr.bf16.mxu0 0
        %1618 = vmatpush1.bf16.msra.mxu0 0
        %1619 = vmatprep.subr.bf16.mxu0 0
        %1620 = vmatpush1.bf16.msra.mxu0 %v1603
        %1621 = vmatprep.subr.bf16.mxu0 0
        %1622 = vmatpush2.bf16.msra.mxu0 0
        %1623 = vmatprep.subr.bf16.mxu0 0
        %1624 = vmatpush2.bf16.msra.mxu0 0
        %1625 = vmatprep.subr.bf16.mxu0 0
        %1626 = vmatpush2.bf16.msra.mxu0 0
        %1627 = vmatprep.subr.bf16.mxu0 0
        %1628 = vmatpush2.bf16.msra.mxu0 0
        %1629 = vmatprep.subr.bf16.mxu0 0
        %1630 = vmatpush2.bf16.msra.mxu0 0
        %1631 = vmatprep.subr.bf16.mxu0 0
        %1632 = vmatpush2.bf16.msra.mxu0 0
        %1633 = vmatprep.subr.bf16.mxu0 0
        %1634 = vmatpush2.bf16.msra.mxu0 0
        %1635 = vmatprep.subr.bf16.mxu0 0
        %1636 = vmatpush2.bf16.msra.mxu0 0
        %1637 = vmatprep.mubr.bf16.mxu0 0
        %1638 = vmatmul.mubr.bf16.gmra.mxu0 %v1600
        %v1639 = vpop.f32.mrf.mxu0
        %v1640 = vadd.f32 0.0, %v1639
        %v1641 = vpop.f32.mrf.mxu0
        %v1642 = vpop.f32.mrf.mxu0
        %v1643 = vpop.f32.mrf.mxu0
        %1644 = vdwg.mxu0
        %v1646 = vsel %vm1315, %v1546, 0
        %v1649 = vsel %vm1555, %v1550, 0
        %1651 = vmatprep.subr.bf16.mxu0 0
        %1652 = vmatpush1.bf16.msra.mxu0 0
        %1653 = vmatprep.subr.bf16.mxu0 0
        %1654 = vmatpush1.bf16.msra.mxu0 0
        %1655 = vmatprep.subr.bf16.mxu0 0
        %1656 = vmatpush1.bf16.msra.mxu0 0
        %1657 = vmatprep.subr.bf16.mxu0 0
        %1658 = vmatpush1.bf16.msra.mxu0 0
        %1659 = vmatprep.subr.bf16.mxu0 0
        %1660 = vmatpush1.bf16.msra.mxu0 0
        %1661 = vmatprep.subr.bf16.mxu0 0
        %1662 = vmatpush1.bf16.msra.mxu0 0
        %1663 = vmatprep.subr.bf16.mxu0 0
        %1664 = vmatpush1.bf16.msra.mxu0 0
        %1665 = vmatprep.subr.bf16.mxu0 0
        %1666 = vmatpush1.bf16.msra.mxu0 %v1649
        %1667 = vmatprep.subr.bf16.mxu0 0
        %1668 = vmatpush2.bf16.msra.mxu0 0
        %1669 = vmatprep.subr.bf16.mxu0 0
        %1670 = vmatpush2.bf16.msra.mxu0 0
        %1671 = vmatprep.subr.bf16.mxu0 0
        %1672 = vmatpush2.bf16.msra.mxu0 0
        %1673 = vmatprep.subr.bf16.mxu0 0
        %1674 = vmatpush2.bf16.msra.mxu0 0
        %1675 = vmatprep.subr.bf16.mxu0 0
        %1676 = vmatpush2.bf16.msra.mxu0 0
        %1677 = vmatprep.subr.bf16.mxu0 0
        %1678 = vmatpush2.bf16.msra.mxu0 0
        %1679 = vmatprep.subr.bf16.mxu0 0
        %1680 = vmatpush2.bf16.msra.mxu0 0
        %1681 = vmatprep.subr.bf16.mxu0 0
        %1682 = vmatpush2.bf16.msra.mxu0 0
        %1683 = vmatprep.mubr.bf16.mxu0 0
        %1684 = vmatmul.mubr.bf16.gmra.mxu0 %v1646
        %v1685 = vpop.f32.mrf.mxu0
        %v1686 = vadd.f32 0.0, %v1685
        %v1687 = vpop.f32.mrf.mxu0
        %v1688 = vpop.f32.mrf.mxu0
        %v1689 = vpop.f32.mrf.mxu0
        %1690 = vdwg.mxu0
        %v1692 = vsel %vm1315, %v1547, 0
        %v1695 = vsel %vm1555, %v1551, 0
        %1697 = vmatprep.subr.bf16.mxu0 0
        %1698 = vmatpush1.bf16.msra.mxu0 0
        %1699 = vmatprep.subr.bf16.mxu0 0
        %1700 = vmatpush1.bf16.msra.mxu0 0
        %1701 = vmatprep.subr.bf16.mxu0 0
        %1702 = vmatpush1.bf16.msra.mxu0 0
        %1703 = vmatprep.subr.bf16.mxu0 0
        %1704 = vmatpush1.bf16.msra.mxu0 0
        %1705 = vmatprep.subr.bf16.mxu0 0
        %1706 = vmatpush1.bf16.msra.mxu0 0
        %1707 = vmatprep.subr.bf16.mxu0 0
        %1708 = vmatpush1.bf16.msra.mxu0 0
        %1709 = vmatprep.subr.bf16.mxu0 0
        %1710 = vmatpush1.bf16.msra.mxu0 0
        %1711 = vmatprep.subr.bf16.mxu0 0
        %1712 = vmatpush1.bf16.msra.mxu0 %v1695
        %1713 = vmatprep.subr.bf16.mxu0 0
        %1714 = vmatpush2.bf16.msra.mxu0 0
        %1715 = vmatprep.subr.bf16.mxu0 0
        %1716 = vmatpush2.bf16.msra.mxu0 0
        %1717 = vmatprep.subr.bf16.mxu0 0
        %1718 = vmatpush2.bf16.msra.mxu0 0
        %1719 = vmatprep.subr.bf16.mxu0 0
        %1720 = vmatpush2.bf16.msra.mxu0 0
        %1721 = vmatprep.subr.bf16.mxu0 0
        %1722 = vmatpush2.bf16.msra.mxu0 0
        %1723 = vmatprep.subr.bf16.mxu0 0
        %1724 = vmatpush2.bf16.msra.mxu0 0
        %1725 = vmatprep.subr.bf16.mxu0 0
        %1726 = vmatpush2.bf16.msra.mxu0 0
        %1727 = vmatprep.subr.bf16.mxu0 0
        %1728 = vmatpush2.bf16.msra.mxu0 0
        %1729 = vmatprep.mubr.bf16.mxu0 0
        %1730 = vmatmul.mubr.bf16.gmra.mxu0 %v1692
        %v1731 = vpop.f32.mrf.mxu0
        %v1732 = vadd.f32 0.0, %v1731
        %v1733 = vpop.f32.mrf.mxu0
        %v1734 = vpop.f32.mrf.mxu0
        %v1735 = vpop.f32.mrf.mxu0
        %1736 = vdwg.mxu0
        %v1737 = vxor.u32 %v1139, 2147483648
        %v1738 = vxor.u32 %v1191, 2147483648
        %v1739 = vxor.u32 %v1243, 2147483648
        %v1740 = vxor.u32 %v1295, 2147483648
        %v1741 = vmul.f32 %v1737, 1.442695
        %v1742 = vpow.pop %v1741
        %v1743 = vmul.f32 %v1738, 1.442695
        %v1744 = vpow.pop %v1743
        %v1745 = vmul.f32 %v1739, 1.442695
        %v1746 = vpow.pop %v1745
        %v1747 = vmul.f32 %v1740, 1.442695
        %v1748 = vpow.pop %v1747
        %v1749 = vadd.f32 %v1742, 1.0
        %v1750 = vadd.f32 %v1744, 1.0
        %v1751 = vadd.f32 %v1746, 1.0
        %v1752 = vadd.f32 %v1748, 1.0
        %v1753 = vrcp.pop %v1749
        %v1754 = vmul.f32 1.0, %v1753
        %v1755 = vrcp.pop %v1750
        %v1756 = vmul.f32 1.0, %v1755
        %v1757 = vrcp.pop %v1751
        %v1758 = vmul.f32 1.0, %v1757
        %v1759 = vrcp.pop %v1752
        %v1760 = vmul.f32 1.0, %v1759
        %v1761 = vmul.f32 %v1594, %v1754
        %v1762 = vmul.f32 %v1640, %v1756
        %v1763 = vmul.f32 %v1686, %v1758
        %v1764 = vmul.f32 %v1732, %v1760
        %v1765 = vpack.c.bf16 %v1761, %v1761
        %v1766 = vpack.c.bf16 %v1762, %v1762
        %v1767 = vpack.c.bf16 %v1763, %v1763
        %v1768 = vpack.c.bf16 %v1764, %v1764
        %v1769 = vld [vmem:[%s8] sm:$0xf]
        %v1770 = vld [vmem:[%s8 + $0x4] sm:$0xf]
        %v1771 = vld [vmem:[%s8 + $0x8] sm:$0xf]
        %v1772 = vld [vmem:[%s8 + $0xc] sm:$0xf]
        %v1774 = vsel %vm1315, %v1765, 0
        %v1777 = vsel %vm1555, %v1769, 0
        %1779 = vmatprep.subr.bf16.mxu0 0
        %1780 = vmatpush1.bf16.msra.mxu0 0
        %1781 = vmatprep.subr.bf16.mxu0 0
        %1782 = vmatpush1.bf16.msra.mxu0 0
        %1783 = vmatprep.subr.bf16.mxu0 0
        %1784 = vmatpush1.bf16.msra.mxu0 0
        %1785 = vmatprep.subr.bf16.mxu0 0
        %1786 = vmatpush1.bf16.msra.mxu0 0
        %1787 = vmatprep.subr.bf16.mxu0 0
        %1788 = vmatpush1.bf16.msra.mxu0 0
        %1789 = vmatprep.subr.bf16.mxu0 0
        %1790 = vmatpush1.bf16.msra.mxu0 0
        %1791 = vmatprep.subr.bf16.mxu0 0
        %1792 = vmatpush1.bf16.msra.mxu0 0
        %1793 = vmatprep.subr.bf16.mxu0 0
        %1794 = vmatpush1.bf16.msra.mxu0 %v1777
        %1795 = vmatprep.subr.bf16.mxu0 0
        %1796 = vmatpush2.bf16.msra.mxu0 0
        %1797 = vmatprep.subr.bf16.mxu0 0
        %1798 = vmatpush2.bf16.msra.mxu0 0
        %1799 = vmatprep.subr.bf16.mxu0 0
        %1800 = vmatpush2.bf16.msra.mxu0 0
        %1801 = vmatprep.subr.bf16.mxu0 0
        %1802 = vmatpush2.bf16.msra.mxu0 0
        %1803 = vmatprep.subr.bf16.mxu0 0
        %1804 = vmatpush2.bf16.msra.mxu0 0
        %1805 = vmatprep.subr.bf16.mxu0 0
        %1806 = vmatpush2.bf16.msra.mxu0 0
        %1807 = vmatprep.subr.bf16.mxu0 0
        %1808 = vmatpush2.bf16.msra.mxu0 0
        %1809 = vmatprep.subr.bf16.mxu0 0
        %1810 = vmatpush2.bf16.msra.mxu0 0
        %1811 = vmatprep.mubr.bf16.mxu0 0
        %1812 = vmatmul.mubr.bf16.gmra.mxu0 %v1774
        %v1813 = vpop.f32.mrf.mxu0
        %v1814 = vadd.f32 0.0, %v1813
        %v1815 = vpop.f32.mrf.mxu0
        %v1816 = vpop.f32.mrf.mxu0
        %v1817 = vpop.f32.mrf.mxu0
        %1818 = vdwg.mxu0
        %v1820 = vsel %vm1315, %v1766, 0
        %v1823 = vsel %vm1555, %v1770, 0
        %1825 = vmatprep.subr.bf16.mxu0 0
        %1826 = vmatpush1.bf16.msra.mxu0 0
        %1827 = vmatprep.subr.bf16.mxu0 0
        %1828 = vmatpush1.bf16.msra.mxu0 0
        %1829 = vmatprep.subr.bf16.mxu0 0
        %1830 = vmatpush1.bf16.msra.mxu0 0
        %1831 = vmatprep.subr.bf16.mxu0 0
        %1832 = vmatpush1.bf16.msra.mxu0 0
        %1833 = vmatprep.subr.bf16.mxu0 0
        %1834 = vmatpush1.bf16.msra.mxu0 0
        %1835 = vmatprep.subr.bf16.mxu0 0
        %1836 = vmatpush1.bf16.msra.mxu0 0
        %1837 = vmatprep.subr.bf16.mxu0 0
        %1838 = vmatpush1.bf16.msra.mxu0 0
        %1839 = vmatprep.subr.bf16.mxu0 0
        %1840 = vmatpush1.bf16.msra.mxu0 %v1823
        %1841 = vmatprep.subr.bf16.mxu0 0
        %1842 = vmatpush2.bf16.msra.mxu0 0
        %1843 = vmatprep.subr.bf16.mxu0 0
        %1844 = vmatpush2.bf16.msra.mxu0 0
        %1845 = vmatprep.subr.bf16.mxu0 0
        %1846 = vmatpush2.bf16.msra.mxu0 0
        %1847 = vmatprep.subr.bf16.mxu0 0
        %1848 = vmatpush2.bf16.msra.mxu0 0
        %1849 = vmatprep.subr.bf16.mxu0 0
        %1850 = vmatpush2.bf16.msra.mxu0 0
        %1851 = vmatprep.subr.bf16.mxu0 0
        %1852 = vmatpush2.bf16.msra.mxu0 0
        %1853 = vmatprep.subr.bf16.mxu0 0
        %1854 = vmatpush2.bf16.msra.mxu0 0
        %1855 = vmatprep.subr.bf16.mxu0 0
        %1856 = vmatpush2.bf16.msra.mxu0 0
        %1857 = vmatprep.mubr.bf16.mxu0 0
        %1858 = vmatmul.mubr.bf16.gmra.mxu0 %v1820
        %v1859 = vpop.f32.mrf.mxu0
        %v1860 = vadd.f32 0.0, %v1859
        %v1861 = vpop.f32.mrf.mxu0
        %v1862 = vpop.f32.mrf.mxu0
        %v1863 = vpop.f32.mrf.mxu0
        %1864 = vdwg.mxu0
        %v1866 = vsel %vm1315, %v1767, 0
        %v1869 = vsel %vm1555, %v1771, 0
        %1871 = vmatprep.subr.bf16.mxu0 0
        %1872 = vmatpush1.bf16.msra.mxu0 0
        %1873 = vmatprep.subr.bf16.mxu0 0
        %1874 = vmatpush1.bf16.msra.mxu0 0
        %1875 = vmatprep.subr.bf16.mxu0 0
        %1876 = vmatpush1.bf16.msra.mxu0 0
        %1877 = vmatprep.subr.bf16.mxu0 0
        %1878 = vmatpush1.bf16.msra.mxu0 0
        %1879 = vmatprep.subr.bf16.mxu0 0
        %1880 = vmatpush1.bf16.msra.mxu0 0
        %1881 = vmatprep.subr.bf16.mxu0 0
        %1882 = vmatpush1.bf16.msra.mxu0 0
        %1883 = vmatprep.subr.bf16.mxu0 0
        %1884 = vmatpush1.bf16.msra.mxu0 0
        %1885 = vmatprep.subr.bf16.mxu0 0
        %1886 = vmatpush1.bf16.msra.mxu0 %v1869
        %1887 = vmatprep.subr.bf16.mxu0 0
        %1888 = vmatpush2.bf16.msra.mxu0 0
        %1889 = vmatprep.subr.bf16.mxu0 0
        %1890 = vmatpush2.bf16.msra.mxu0 0
        %1891 = vmatprep.subr.bf16.mxu0 0
        %1892 = vmatpush2.bf16.msra.mxu0 0
        %1893 = vmatprep.subr.bf16.mxu0 0
        %1894 = vmatpush2.bf16.msra.mxu0 0
        %1895 = vmatprep.subr.bf16.mxu0 0
        %1896 = vmatpush2.bf16.msra.mxu0 0
        %1897 = vmatprep.subr.bf16.mxu0 0
        %1898 = vmatpush2.bf16.msra.mxu0 0
        %1899 = vmatprep.subr.bf16.mxu0 0
        %1900 = vmatpush2.bf16.msra.mxu0 0
        %1901 = vmatprep.subr.bf16.mxu0 0
        %1902 = vmatpush2.bf16.msra.mxu0 0
        %1903 = vmatprep.mubr.bf16.mxu0 0
        %1904 = vmatmul.mubr.bf16.gmra.mxu0 %v1866
        %v1905 = vpop.f32.mrf.mxu0
        %v1906 = vadd.f32 0.0, %v1905
        %v1907 = vpop.f32.mrf.mxu0
        %v1908 = vpop.f32.mrf.mxu0
        %v1909 = vpop.f32.mrf.mxu0
        %1910 = vdwg.mxu0
        %v1912 = vsel %vm1315, %v1768, 0
        %v1915 = vsel %vm1555, %v1772, 0
        %1917 = vmatprep.subr.bf16.mxu0 0
        %1918 = vmatpush1.bf16.msra.mxu0 0
        %1919 = vmatprep.subr.bf16.mxu0 0
        %1920 = vmatpush1.bf16.msra.mxu0 0
        %1921 = vmatprep.subr.bf16.mxu0 0
        %1922 = vmatpush1.bf16.msra.mxu0 0
        %1923 = vmatprep.subr.bf16.mxu0 0
        %1924 = vmatpush1.bf16.msra.mxu0 0
        %1925 = vmatprep.subr.bf16.mxu0 0
        %1926 = vmatpush1.bf16.msra.mxu0 0
        %1927 = vmatprep.subr.bf16.mxu0 0
        %1928 = vmatpush1.bf16.msra.mxu0 0
        %1929 = vmatprep.subr.bf16.mxu0 0
        %1930 = vmatpush1.bf16.msra.mxu0 0
        %1931 = vmatprep.subr.bf16.mxu0 0
        %1932 = vmatpush1.bf16.msra.mxu0 %v1915
        %1933 = vmatprep.subr.bf16.mxu0 0
        %1934 = vmatpush2.bf16.msra.mxu0 0
        %1935 = vmatprep.subr.bf16.mxu0 0
        %1936 = vmatpush2.bf16.msra.mxu0 0
        %1937 = vmatprep.subr.bf16.mxu0 0
        %1938 = vmatpush2.bf16.msra.mxu0 0
        %1939 = vmatprep.subr.bf16.mxu0 0
        %1940 = vmatpush2.bf16.msra.mxu0 0
        %1941 = vmatprep.subr.bf16.mxu0 0
        %1942 = vmatpush2.bf16.msra.mxu0 0
        %1943 = vmatprep.subr.bf16.mxu0 0
        %1944 = vmatpush2.bf16.msra.mxu0 0
        %1945 = vmatprep.subr.bf16.mxu0 0
        %1946 = vmatpush2.bf16.msra.mxu0 0
        %1947 = vmatprep.subr.bf16.mxu0 0
        %1948 = vmatpush2.bf16.msra.mxu0 0
        %1949 = vmatprep.mubr.bf16.mxu0 0
        %1950 = vmatmul.mubr.bf16.gmra.mxu0 %v1912
        %v1951 = vpop.f32.mrf.mxu0
        %v1952 = vadd.f32 0.0, %v1951
        %v1953 = vpop.f32.mrf.mxu0
        %v1954 = vpop.f32.mrf.mxu0
        %v1955 = vpop.f32.mrf.mxu0
        %1956 = vdwg.mxu0
        %v1957 = vadd.f32 %v1814, %v1860
        %v1958 = vadd.f32 %v1957, %v1906
        %v1959 = vadd.f32 %v1958, %v1952
        %1960 = vst [vmem:[%s334] sm:$0xff] %v1959
        %s1961 = sand.u32 %s230, 1
        %s1962 = scalar_lea.sflag [#allocation3], %s1961
        %s1963 = sand.u32 %s230, 1
        %s1964 = smul.addr %s1963, 8
        %s1965 = scalar_lea.vmem [#allocation2], %s1964
        // Predicated region
        $region57: #{tpu_custom_call.1} parent=55 // pred_check
          %p1966 = pneg %p240
        $region58: #{tpu_custom_call.1} parent=55 // pred_check_branch
          %1968 = sbr.rel (%p1966) target = $region60
        $region59: #{tpu_custom_call.1} parent=55 // pred_region
          %s1970 = ssub.s32 128, 128
          %1971 = vsyncadd %s1962, %s1970
          %s1972 = smul.addr %s23, 128
          %s1973 = scalar_lea.hbm %s9, %s1972
          %s1975 = sshll.u32 %s1965, 4
          %s1976 = int_to_ptr.vmem [resolvable:$true] %s1975
          %1978 = dma.vmem_to_hbm [thread:$0]  %s1976, 128, %s1973, %s1962
        $region60: #{tpu_custom_call.1} parent=55 // pred_fallthru
          _
      $region56: #{tpu_custom_call.1} parent=5 // pred_fallthru
        _
      %p1979 = scmp.le.s32.totalorder 2, %s18
      // Predicated region
      $region61: #{tpu_custom_call.1} parent=5 // pred_check
        %p1980 = pneg %p1979
      $region62: #{tpu_custom_call.1} parent=5 // pred_check_branch
        %1982 = sbr.rel (%p1980) target = $region64
      $region63: #{tpu_custom_call.1} parent=5 // pred_region
        %s1983 = ssub.s32 %s18, 2
        // Predicated region
        $region65: #{tpu_custom_call.1} parent=63 // pred_check
          %p1984 = pneg %p246
        $region66: #{tpu_custom_call.1} parent=63 // pred_check_branch
          %1986 = sbr.rel (%p1984) target = $region68
        $region67: #{tpu_custom_call.1} parent=63 // pred_region
          %s1987 = sand.u32 %s231, 1
          %s1988 = scalar_lea.sflag [#allocation3], %s1987
          %s1989 = sand.u32 %s231, 1
          %s1990 = smul.addr %s1989, 8
          %s1991 = scalar_lea.vmem [#allocation2], %s1990
          %1992 = dma.done %s1988, 128
        $region68: #{tpu_custom_call.1} parent=63 // pred_fallthru
          _
      $region64: #{tpu_custom_call.1} parent=5 // pred_fallthru
        _
    $region6: #{tpu_custom_call.1} parent=1 // loop_footer
      %s22 = sadd.s32 1, %s18
    $region7: #{tpu_custom_call.1} parent=1 // loop_footer_branch
      %17 = sbr.rel target = $region3
    $region8: #{tpu_custom_call.1} parent=1 // loop_exit
      _
    %1993 = vsyncpa [#allocation3], 1
    %s1994 = scalar_lea.sflag [#allocation3], 1
    %1995 = vsyncpa %s1994, 1

</llo_original>
